<compile_context>
chip_gen: v6e
topology: v6e:2x2x1
jax: 0.10.0
libtpu: 0.0.40
codegen_flags: <defaults>
</compile_context>

<pallas_src>
import jax
import jax.numpy as jnp
from jax.experimental import pallas as pl
from jax.experimental.pallas import tpu as pltpu


def _lstm_fc_kernel(x_ref, wih_ref, whh_ref, wfc_ref, bfc_ref, o_ref):
    TB, _ = x_ref.shape             # time-major flattened: row index = t*BP + b
    H = whh_ref.shape[0]
    G = 4 * H
    BP = o_ref.shape[0]             # padded batch (multiple of 8 sublanes)
    T = TB // BP

    # One fused input projection for every timestep.  The fused (b_ih + b_hh) bias
    # rides along inside the matmul via the 1.0 column of x / bias row of w_ih, so
    # there is no separate bias operand or VPU add here.
    xproj = jnp.dot(x_ref[...], wih_ref[...],
                    preferred_element_type=jnp.float32)       # (T*BP, 4H)

    whh = whh_ref[...]                                        # (H, 4H)

    # Lane mask selecting the g-gate lanes; PyTorch gate order is i, f, g, o.
    lane = jax.lax.broadcasted_iota(jnp.int32, (BP, G), dimension=1)
    g_lanes = (lane >= 2 * H) & (lane < 3 * H)

    h = jnp.zeros((BP, H), jnp.float32)
    c = jnp.zeros((BP, H), jnp.float32)

    # T is small & static: straight-line unrolled recurrence, h/c stay in vregs.
    for t in range(T):
        gates = xproj[t * BP:(t + 1) * BP, :] + jnp.dot(
            h, whh, preferred_element_type=jnp.float32)       # (BP, 4H)

        # Single EUP pass: sigmoid over the full vreg; tanh(x) == 2*sigmoid(2x) - 1
        # on the g-gate lanes, restored with two cheap VPU selects.
        pre = jnp.where(g_lanes, gates * 2.0, gates)
        s = jax.nn.sigmoid(pre)
        act = jnp.where(g_lanes, s * 2.0 - 1.0, s)

        i_g = act[:, 0:H]
        f_g = act[:, H:2 * H]
        g_g = act[:, 2 * H:3 * H]
        o_g = act[:, 3 * H:4 * H]
        c = f_g * c + i_g * g_g
        h = o_g * jnp.tanh(c)

    # fc1 on the final hidden state, then log_softmax over the (padded) lane dim.
    logits = (jnp.dot(h, wfc_ref[...], preferred_element_type=jnp.float32)
              + bfc_ref[...])                                 # (BP, DP)
    m = jnp.max(logits, axis=1, keepdims=True)
    shifted = logits - m
    lse = jnp.log(jnp.sum(jnp.exp(shifted), axis=1, keepdims=True))
    o_ref[...] = (shifted - lse).astype(o_ref.dtype)


def predict_next_card(x, params):
    """x: (B, T, input_dim) float32 (batch_first). Returns (B, output_dim) log-probs."""
    w_ih, w_hh, b_ih, b_hh, w_fc, b_fc = (
        params["w_ih"], params["w_hh"], params["b_ih"], params["b_hh"],
        params["w_fc"], params["b_fc"])

    B, T, D_in = x.shape
    H = w_hh.shape[1]
    D_out = w_fc.shape[0]

    # Sublane-pad the batch (>=8 rows); lane-pad features (+1 bias column) and the
    # fc output to >=128 lanes for clean (8,128) tiles.
    BP = max(8, ((B + 7) // 8) * 8)
    KP = max(128, ((D_in + 1 + 127) // 128) * 128)
    DP = max(128, ((D_out + 127) // 128) * 128)

    # Time-major + flatten so the kernel can do one fused input projection and take
    # 8-row sublane-aligned per-step slices.  Column D_in is a constant 1.0 that
    # carries the fused LSTM bias through the matmul; remaining pad columns are 0.
    x_pad = jnp.pad(x.astype(jnp.float32), ((0, BP - B), (0, 0), (0, KP - D_in)))
    x_pad = x_pad.at[:, :, D_in].set(1.0)
    x_tm = jnp.transpose(x_pad, (1, 0, 2)).reshape(T * BP, KP)     # (T*BP, KP)

    # Input-projection weights padded to KP sublanes; row D_in holds (b_ih + b_hh).
    wih_p = jnp.zeros((KP, 4 * H), jnp.float32)
    wih_p = wih_p.at[:D_in, :].set(jnp.transpose(w_ih))
    wih_p = wih_p.at[D_in, :].set(b_ih + b_hh)

    whh_t = jnp.transpose(w_hh)                                    # (H, 4H)

    # fc1 weights padded to DP lanes: zero weights + large-negative (f32-safe, finite)
    # bias on the padded columns so they vanish under log-softmax.
    neg_big = float(jnp.finfo(jnp.float32).min) / 2
    wfc_t = jnp.pad(jnp.transpose(w_fc), ((0, 0), (0, DP - D_out)))            # (H, DP)
    bfc = jnp.pad(b_fc.reshape(1, D_out), ((0, 0), (0, DP - D_out)),
                  constant_values=neg_big)                                     # (1, DP)

    vmem = pl.BlockSpec(memory_space=pltpu.MemorySpace.VMEM)
    out_pad = pl.pallas_call(
        _lstm_fc_kernel,
        out_shape=jax.ShapeDtypeStruct((BP, DP), jnp.float32),
        in_specs=[vmem] * 5,
        out_specs=vmem,
    )(x_tm, wih_p, whh_t, wfc_t, bfc)

    return out_pad[:B, :D_out]


def _init_params(key, input_dim, hidden_dim, output_dim):
    """Deterministic init mirroring PyTorch shapes (uniform +-1/sqrt(H))."""
    ks = jax.random.split(key, 6)
    k = 1.0 / jnp.sqrt(hidden_dim)
    u = lambda kk, shape: jax.random.uniform(kk, shape, jnp.float32, -k, k)
    return {
        "w_ih": u(ks[0], (4 * hidden_dim, input_dim)),
        "w_hh": u(ks[1], (4 * hidden_dim, hidden_dim)),
        "b_ih": u(ks[2], (4 * hidden_dim,)),
        "b_hh": u(ks[3], (4 * hidden_dim,)),
        "w_fc": u(ks[4], (output_dim, hidden_dim)),
        "b_fc": u(ks[5], (output_dim,)),
    }


def _reference(x, p):
    """Plain-JAX reference of the PyTorch forward for a correctness check."""
    B, T, D_in = x.shape
    H = p["w_hh"].shape[1]
    h = jnp.zeros((B, H), jnp.float32)
    c = jnp.zeros((B, H), jnp.float32)
    for t in range(T):
        g = x[:, t, :] @ p["w_ih"].T + p["b_ih"] + h @ p["w_hh"].T + p["b_hh"]
        i = jax.nn.sigmoid(g[:, 0:H])
        f = jax.nn.sigmoid(g[:, H:2 * H])
        gg = jnp.tanh(g[:, 2 * H:3 * H])
        o = jax.nn.sigmoid(g[:, 3 * H:4 * H])
        c = f * c + i * gg
        h = o * jnp.tanh(c)
    logits = h @ p["w_fc"].T + p["b_fc"]
    return jax.nn.log_softmax(logits, axis=1)


if __name__ == "__main__":
    INPUT_DIM, OUTPUT_DIM = 50, 20
    HIDDEN_DIM = 32
    B, T = 2, 8

    key = jax.random.PRNGKey(0)
    kx, kp = jax.random.split(key)
    x = jax.random.normal(kx, (B, T, INPUT_DIM), jnp.float32)
    params = _init_params(kp, INPUT_DIM, HIDDEN_DIM, OUTPUT_DIM)

    out = predict_next_card(x, params)
    out = jax.block_until_ready(out)

    ref = _reference(x, params)
    assert out.shape == (B, OUTPUT_DIM)
    assert jnp.allclose(out, ref, atol=1e-4, rtol=1e-4), "mismatch vs reference"

    print("KERNEL_OK")
</pallas_src>

<mosaic_0001>
module attributes {stable_mosaic.version = 11 : i64} {
  func.func @_lstm_fc_kernel(%arg0: memref<64x128xf32, #tpu.memory_space<vmem>>, %arg1: memref<128x128xf32, #tpu.memory_space<vmem>>, %arg2: memref<32x128xf32, #tpu.memory_space<vmem>>, %arg3: memref<32x128xf32, #tpu.memory_space<vmem>>, %arg4: memref<1x128xf32, #tpu.memory_space<vmem>>, %arg5: memref<8x128xf32, #tpu.memory_space<vmem>>) attributes {dimension_semantics = [], scalar_prefetch = 0 : i64, scratch_operands = 0 : i64, tpu.core_type = #tpu.core_type<tc>} {
    %c0 = arith.constant 0 : index
    %c0_0 = arith.constant 0 : index
    %0 = vector.load %arg0[%c0, %c0_0] : memref<64x128xf32, #tpu.memory_space<vmem>>, vector<64x128xf32>
    %c0_1 = arith.constant 0 : index
    %c0_2 = arith.constant 0 : index
    %1 = vector.load %arg1[%c0_1, %c0_2] : memref<128x128xf32, #tpu.memory_space<vmem>>, vector<128x128xf32>
    %cst = arith.constant dense<0.000000e+00> : vector<64x128xf32>
    %2 = tpu.matmul %0, %1, %cst {dimension_numbers = #tpu.dot_dimension_numbers<[1], [0], [0], [1], [0, 0, 1, 1], [], []>} : vector<64x128xf32>, vector<128x128xf32>, vector<64x128xf32> -> vector<64x128xf32>
    %c0_3 = arith.constant 0 : index
    %c0_4 = arith.constant 0 : index
    %3 = vector.load %arg2[%c0_3, %c0_4] : memref<32x128xf32, #tpu.memory_space<vmem>>, vector<32x128xf32>
    %4 = tpu.iota {dimensions = array<i32: 1>} : vector<8x128xi32>
    %c64_i32 = arith.constant 64 : i32
    %5 = vector.broadcast %c64_i32 : i32 to vector<8x128xi32>
    %6 = arith.cmpi sge, %4, %5 : vector<8x128xi32>
    %c96_i32 = arith.constant 96 : i32
    %7 = vector.broadcast %c96_i32 : i32 to vector<8x128xi32>
    %8 = arith.cmpi slt, %4, %7 : vector<8x128xi32>
    %9 = arith.andi %6, %8 : vector<8x128xi1>
    %cst_5 = arith.constant 0.000000e+00 : f32
    %10 = vector.broadcast %cst_5 : f32 to vector<8x32xf32>
    %cst_6 = arith.constant 0.000000e+00 : f32
    %11 = vector.broadcast %cst_6 : f32 to vector<8x32xf32>
    %12 = vector.extract_strided_slice %2 {offsets = [0, 0], sizes = [8, 128], strides = [1, 1]} : vector<64x128xf32> to vector<8x128xf32>
    %cst_7 = arith.constant dense<0.000000e+00> : vector<8x128xf32>
    %13 = tpu.matmul %10, %3, %cst_7 {dimension_numbers = #tpu.dot_dimension_numbers<[1], [0], [0], [1], [0, 0, 1, 1], [], []>} : vector<8x32xf32>, vector<32x128xf32>, vector<8x128xf32> -> vector<8x128xf32>
    %14 = arith.addf %12, %13 : vector<8x128xf32>
    %cst_8 = arith.constant 2.000000e+00 : f32
    %15 = vector.broadcast %cst_8 : f32 to vector<8x128xf32>
    %16 = arith.mulf %14, %15 : vector<8x128xf32>
    %17 = arith.select %9, %16, %14 : vector<8x128xi1>, vector<8x128xf32>
    %18 = arith.negf %17 : vector<8x128xf32>
    %19 = math.exp %18 : vector<8x128xf32>
    %cst_9 = arith.constant 1.000000e+00 : f32
    %20 = vector.broadcast %cst_9 : f32 to vector<8x128xf32>
    %21 = arith.addf %20, %19 : vector<8x128xf32>
    %22 = arith.divf %20, %21 : vector<8x128xf32>
    %cst_10 = arith.constant 2.000000e+00 : f32
    %23 = vector.broadcast %cst_10 : f32 to vector<8x128xf32>
    %24 = arith.mulf %22, %23 : vector<8x128xf32>
    %cst_11 = arith.constant 1.000000e+00 : f32
    %25 = vector.broadcast %cst_11 : f32 to vector<8x128xf32>
    %26 = arith.subf %24, %25 : vector<8x128xf32>
    %27 = arith.select %9, %26, %22 : vector<8x128xi1>, vector<8x128xf32>
    %28 = vector.extract_strided_slice %27 {offsets = [0, 0], sizes = [8, 32], strides = [1, 1]} : vector<8x128xf32> to vector<8x32xf32>
    %29 = vector.extract_strided_slice %27 {offsets = [0, 32], sizes = [8, 32], strides = [1, 1]} : vector<8x128xf32> to vector<8x32xf32>
    %30 = vector.extract_strided_slice %27 {offsets = [0, 64], sizes = [8, 32], strides = [1, 1]} : vector<8x128xf32> to vector<8x32xf32>
    %31 = vector.extract_strided_slice %27 {offsets = [0, 96], sizes = [8, 32], strides = [1, 1]} : vector<8x128xf32> to vector<8x32xf32>
    %32 = arith.mulf %29, %11 : vector<8x32xf32>
    %33 = arith.mulf %28, %30 : vector<8x32xf32>
    %34 = arith.addf %32, %33 : vector<8x32xf32>
    %35 = math.tanh %34 : vector<8x32xf32>
    %36 = arith.mulf %31, %35 : vector<8x32xf32>
    %37 = vector.extract_strided_slice %2 {offsets = [8, 0], sizes = [8, 128], strides = [1, 1]} : vector<64x128xf32> to vector<8x128xf32>
    %cst_12 = arith.constant dense<0.000000e+00> : vector<8x128xf32>
    %38 = tpu.matmul %36, %3, %cst_12 {dimension_numbers = #tpu.dot_dimension_numbers<[1], [0], [0], [1], [0, 0, 1, 1], [], []>} : vector<8x32xf32>, vector<32x128xf32>, vector<8x128xf32> -> vector<8x128xf32>
    %39 = arith.addf %37, %38 : vector<8x128xf32>
    %cst_13 = arith.constant 2.000000e+00 : f32
    %40 = vector.broadcast %cst_13 : f32 to vector<8x128xf32>
    %41 = arith.mulf %39, %40 : vector<8x128xf32>
    %42 = arith.select %9, %41, %39 : vector<8x128xi1>, vector<8x128xf32>
    %43 = arith.negf %42 : vector<8x128xf32>
    %44 = math.exp %43 : vector<8x128xf32>
    %cst_14 = arith.constant 1.000000e+00 : f32
    %45 = vector.broadcast %cst_14 : f32 to vector<8x128xf32>
    %46 = arith.addf %45, %44 : vector<8x128xf32>
    %47 = arith.divf %45, %46 : vector<8x128xf32>
    %cst_15 = arith.constant 2.000000e+00 : f32
    %48 = vector.broadcast %cst_15 : f32 to vector<8x128xf32>
    %49 = arith.mulf %47, %48 : vector<8x128xf32>
    %cst_16 = arith.constant 1.000000e+00 : f32
    %50 = vector.broadcast %cst_16 : f32 to vector<8x128xf32>
    %51 = arith.subf %49, %50 : vector<8x128xf32>
    %52 = arith.select %9, %51, %47 : vector<8x128xi1>, vector<8x128xf32>
    %53 = vector.extract_strided_slice %52 {offsets = [0, 0], sizes = [8, 32], strides = [1, 1]} : vector<8x128xf32> to vector<8x32xf32>
    %54 = vector.extract_strided_slice %52 {offsets = [0, 32], sizes = [8, 32], strides = [1, 1]} : vector<8x128xf32> to vector<8x32xf32>
    %55 = vector.extract_strided_slice %52 {offsets = [0, 64], sizes = [8, 32], strides = [1, 1]} : vector<8x128xf32> to vector<8x32xf32>
    %56 = vector.extract_strided_slice %52 {offsets = [0, 96], sizes = [8, 32], strides = [1, 1]} : vector<8x128xf32> to vector<8x32xf32>
    %57 = arith.mulf %54, %34 : vector<8x32xf32>
    %58 = arith.mulf %53, %55 : vector<8x32xf32>
    %59 = arith.addf %57, %58 : vector<8x32xf32>
    %60 = math.tanh %59 : vector<8x32xf32>
    %61 = arith.mulf %56, %60 : vector<8x32xf32>
    %62 = vector.extract_strided_slice %2 {offsets = [16, 0], sizes = [8, 128], strides = [1, 1]} : vector<64x128xf32> to vector<8x128xf32>
    %cst_17 = arith.constant dense<0.000000e+00> : vector<8x128xf32>
    %63 = tpu.matmul %61, %3, %cst_17 {dimension_numbers = #tpu.dot_dimension_numbers<[1], [0], [0], [1], [0, 0, 1, 1], [], []>} : vector<8x32xf32>, vector<32x128xf32>, vector<8x128xf32> -> vector<8x128xf32>
    %64 = arith.addf %62, %63 : vector<8x128xf32>
    %cst_18 = arith.constant 2.000000e+00 : f32
    %65 = vector.broadcast %cst_18 : f32 to vector<8x128xf32>
    %66 = arith.mulf %64, %65 : vector<8x128xf32>
    %67 = arith.select %9, %66, %64 : vector<8x128xi1>, vector<8x128xf32>
    %68 = arith.negf %67 : vector<8x128xf32>
    %69 = math.exp %68 : vector<8x128xf32>
    %cst_19 = arith.constant 1.000000e+00 : f32
    %70 = vector.broadcast %cst_19 : f32 to vector<8x128xf32>
    %71 = arith.addf %70, %69 : vector<8x128xf32>
    %72 = arith.divf %70, %71 : vector<8x128xf32>
    %cst_20 = arith.constant 2.000000e+00 : f32
    %73 = vector.broadcast %cst_20 : f32 to vector<8x128xf32>
    %74 = arith.mulf %72, %73 : vector<8x128xf32>
    %cst_21 = arith.constant 1.000000e+00 : f32
    %75 = vector.broadcast %cst_21 : f32 to vector<8x128xf32>
    %76 = arith.subf %74, %75 : vector<8x128xf32>
    %77 = arith.select %9, %76, %72 : vector<8x128xi1>, vector<8x128xf32>
    %78 = vector.extract_strided_slice %77 {offsets = [0, 0], sizes = [8, 32], strides = [1, 1]} : vector<8x128xf32> to vector<8x32xf32>
    %79 = vector.extract_strided_slice %77 {offsets = [0, 32], sizes = [8, 32], strides = [1, 1]} : vector<8x128xf32> to vector<8x32xf32>
    %80 = vector.extract_strided_slice %77 {offsets = [0, 64], sizes = [8, 32], strides = [1, 1]} : vector<8x128xf32> to vector<8x32xf32>
    %81 = vector.extract_strided_slice %77 {offsets = [0, 96], sizes = [8, 32], strides = [1, 1]} : vector<8x128xf32> to vector<8x32xf32>
    %82 = arith.mulf %79, %59 : vector<8x32xf32>
    %83 = arith.mulf %78, %80 : vector<8x32xf32>
    %84 = arith.addf %82, %83 : vector<8x32xf32>
    %85 = math.tanh %84 : vector<8x32xf32>
    %86 = arith.mulf %81, %85 : vector<8x32xf32>
    %87 = vector.extract_strided_slice %2 {offsets = [24, 0], sizes = [8, 128], strides = [1, 1]} : vector<64x128xf32> to vector<8x128xf32>
    %cst_22 = arith.constant dense<0.000000e+00> : vector<8x128xf32>
    %88 = tpu.matmul %86, %3, %cst_22 {dimension_numbers = #tpu.dot_dimension_numbers<[1], [0], [0], [1], [0, 0, 1, 1], [], []>} : vector<8x32xf32>, vector<32x128xf32>, vector<8x128xf32> -> vector<8x128xf32>
    %89 = arith.addf %87, %88 : vector<8x128xf32>
    %cst_23 = arith.constant 2.000000e+00 : f32
    %90 = vector.broadcast %cst_23 : f32 to vector<8x128xf32>
    %91 = arith.mulf %89, %90 : vector<8x128xf32>
    %92 = arith.select %9, %91, %89 : vector<8x128xi1>, vector<8x128xf32>
    %93 = arith.negf %92 : vector<8x128xf32>
    %94 = math.exp %93 : vector<8x128xf32>
    %cst_24 = arith.constant 1.000000e+00 : f32
    %95 = vector.broadcast %cst_24 : f32 to vector<8x128xf32>
    %96 = arith.addf %95, %94 : vector<8x128xf32>
    %97 = arith.divf %95, %96 : vector<8x128xf32>
    %cst_25 = arith.constant 2.000000e+00 : f32
    %98 = vector.broadcast %cst_25 : f32 to vector<8x128xf32>
    %99 = arith.mulf %97, %98 : vector<8x128xf32>
    %cst_26 = arith.constant 1.000000e+00 : f32
    %100 = vector.broadcast %cst_26 : f32 to vector<8x128xf32>
    %101 = arith.subf %99, %100 : vector<8x128xf32>
    %102 = arith.select %9, %101, %97 : vector<8x128xi1>, vector<8x128xf32>
    %103 = vector.extract_strided_slice %102 {offsets = [0, 0], sizes = [8, 32], strides = [1, 1]} : vector<8x128xf32> to vector<8x32xf32>
    %104 = vector.extract_strided_slice %102 {offsets = [0, 32], sizes = [8, 32], strides = [1, 1]} : vector<8x128xf32> to vector<8x32xf32>
    %105 = vector.extract_strided_slice %102 {offsets = [0, 64], sizes = [8, 32], strides = [1, 1]} : vector<8x128xf32> to vector<8x32xf32>
    %106 = vector.extract_strided_slice %102 {offsets = [0, 96], sizes = [8, 32], strides = [1, 1]} : vector<8x128xf32> to vector<8x32xf32>
    %107 = arith.mulf %104, %84 : vector<8x32xf32>
    %108 = arith.mulf %103, %105 : vector<8x32xf32>
    %109 = arith.addf %107, %108 : vector<8x32xf32>
    %110 = math.tanh %109 : vector<8x32xf32>
    %111 = arith.mulf %106, %110 : vector<8x32xf32>
    %112 = vector.extract_strided_slice %2 {offsets = [32, 0], sizes = [8, 128], strides = [1, 1]} : vector<64x128xf32> to vector<8x128xf32>
    %cst_27 = arith.constant dense<0.000000e+00> : vector<8x128xf32>
    %113 = tpu.matmul %111, %3, %cst_27 {dimension_numbers = #tpu.dot_dimension_numbers<[1], [0], [0], [1], [0, 0, 1, 1], [], []>} : vector<8x32xf32>, vector<32x128xf32>, vector<8x128xf32> -> vector<8x128xf32>
    %114 = arith.addf %112, %113 : vector<8x128xf32>
    %cst_28 = arith.constant 2.000000e+00 : f32
    %115 = vector.broadcast %cst_28 : f32 to vector<8x128xf32>
    %116 = arith.mulf %114, %115 : vector<8x128xf32>
    %117 = arith.select %9, %116, %114 : vector<8x128xi1>, vector<8x128xf32>
    %118 = arith.negf %117 : vector<8x128xf32>
    %119 = math.exp %118 : vector<8x128xf32>
    %cst_29 = arith.constant 1.000000e+00 : f32
    %120 = vector.broadcast %cst_29 : f32 to vector<8x128xf32>
    %121 = arith.addf %120, %119 : vector<8x128xf32>
    %122 = arith.divf %120, %121 : vector<8x128xf32>
    %cst_30 = arith.constant 2.000000e+00 : f32
    %123 = vector.broadcast %cst_30 : f32 to vector<8x128xf32>
    %124 = arith.mulf %122, %123 : vector<8x128xf32>
    %cst_31 = arith.constant 1.000000e+00 : f32
    %125 = vector.broadcast %cst_31 : f32 to vector<8x128xf32>
    %126 = arith.subf %124, %125 : vector<8x128xf32>
    %127 = arith.select %9, %126, %122 : vector<8x128xi1>, vector<8x128xf32>
    %128 = vector.extract_strided_slice %127 {offsets = [0, 0], sizes = [8, 32], strides = [1, 1]} : vector<8x128xf32> to vector<8x32xf32>
    %129 = vector.extract_strided_slice %127 {offsets = [0, 32], sizes = [8, 32], strides = [1, 1]} : vector<8x128xf32> to vector<8x32xf32>
    %130 = vector.extract_strided_slice %127 {offsets = [0, 64], sizes = [8, 32], strides = [1, 1]} : vector<8x128xf32> to vector<8x32xf32>
    %131 = vector.extract_strided_slice %127 {offsets = [0, 96], sizes = [8, 32], strides = [1, 1]} : vector<8x128xf32> to vector<8x32xf32>
    %132 = arith.mulf %129, %109 : vector<8x32xf32>
    %133 = arith.mulf %128, %130 : vector<8x32xf32>
    %134 = arith.addf %132, %133 : vector<8x32xf32>
    %135 = math.tanh %134 : vector<8x32xf32>
    %136 = arith.mulf %131, %135 : vector<8x32xf32>
    %137 = vector.extract_strided_slice %2 {offsets = [40, 0], sizes = [8, 128], strides = [1, 1]} : vector<64x128xf32> to vector<8x128xf32>
    %cst_32 = arith.constant dense<0.000000e+00> : vector<8x128xf32>
    %138 = tpu.matmul %136, %3, %cst_32 {dimension_numbers = #tpu.dot_dimension_numbers<[1], [0], [0], [1], [0, 0, 1, 1], [], []>} : vector<8x32xf32>, vector<32x128xf32>, vector<8x128xf32> -> vector<8x128xf32>
    %139 = arith.addf %137, %138 : vector<8x128xf32>
    %cst_33 = arith.constant 2.000000e+00 : f32
    %140 = vector.broadcast %cst_33 : f32 to vector<8x128xf32>
    %141 = arith.mulf %139, %140 : vector<8x128xf32>
    %142 = arith.select %9, %141, %139 : vector<8x128xi1>, vector<8x128xf32>
    %143 = arith.negf %142 : vector<8x128xf32>
    %144 = math.exp %143 : vector<8x128xf32>
    %cst_34 = arith.constant 1.000000e+00 : f32
    %145 = vector.broadcast %cst_34 : f32 to vector<8x128xf32>
    %146 = arith.addf %145, %144 : vector<8x128xf32>
    %147 = arith.divf %145, %146 : vector<8x128xf32>
    %cst_35 = arith.constant 2.000000e+00 : f32
    %148 = vector.broadcast %cst_35 : f32 to vector<8x128xf32>
    %149 = arith.mulf %147, %148 : vector<8x128xf32>
    %cst_36 = arith.constant 1.000000e+00 : f32
    %150 = vector.broadcast %cst_36 : f32 to vector<8x128xf32>
    %151 = arith.subf %149, %150 : vector<8x128xf32>
    %152 = arith.select %9, %151, %147 : vector<8x128xi1>, vector<8x128xf32>
    %153 = vector.extract_strided_slice %152 {offsets = [0, 0], sizes = [8, 32], strides = [1, 1]} : vector<8x128xf32> to vector<8x32xf32>
    %154 = vector.extract_strided_slice %152 {offsets = [0, 32], sizes = [8, 32], strides = [1, 1]} : vector<8x128xf32> to vector<8x32xf32>
    %155 = vector.extract_strided_slice %152 {offsets = [0, 64], sizes = [8, 32], strides = [1, 1]} : vector<8x128xf32> to vector<8x32xf32>
    %156 = vector.extract_strided_slice %152 {offsets = [0, 96], sizes = [8, 32], strides = [1, 1]} : vector<8x128xf32> to vector<8x32xf32>
    %157 = arith.mulf %154, %134 : vector<8x32xf32>
    %158 = arith.mulf %153, %155 : vector<8x32xf32>
    %159 = arith.addf %157, %158 : vector<8x32xf32>
    %160 = math.tanh %159 : vector<8x32xf32>
    %161 = arith.mulf %156, %160 : vector<8x32xf32>
    %162 = vector.extract_strided_slice %2 {offsets = [48, 0], sizes = [8, 128], strides = [1, 1]} : vector<64x128xf32> to vector<8x128xf32>
    %cst_37 = arith.constant dense<0.000000e+00> : vector<8x128xf32>
    %163 = tpu.matmul %161, %3, %cst_37 {dimension_numbers = #tpu.dot_dimension_numbers<[1], [0], [0], [1], [0, 0, 1, 1], [], []>} : vector<8x32xf32>, vector<32x128xf32>, vector<8x128xf32> -> vector<8x128xf32>
    %164 = arith.addf %162, %163 : vector<8x128xf32>
    %cst_38 = arith.constant 2.000000e+00 : f32
    %165 = vector.broadcast %cst_38 : f32 to vector<8x128xf32>
    %166 = arith.mulf %164, %165 : vector<8x128xf32>
    %167 = arith.select %9, %166, %164 : vector<8x128xi1>, vector<8x128xf32>
    %168 = arith.negf %167 : vector<8x128xf32>
    %169 = math.exp %168 : vector<8x128xf32>
    %cst_39 = arith.constant 1.000000e+00 : f32
    %170 = vector.broadcast %cst_39 : f32 to vector<8x128xf32>
    %171 = arith.addf %170, %169 : vector<8x128xf32>
    %172 = arith.divf %170, %171 : vector<8x128xf32>
    %cst_40 = arith.constant 2.000000e+00 : f32
    %173 = vector.broadcast %cst_40 : f32 to vector<8x128xf32>
    %174 = arith.mulf %172, %173 : vector<8x128xf32>
    %cst_41 = arith.constant 1.000000e+00 : f32
    %175 = vector.broadcast %cst_41 : f32 to vector<8x128xf32>
    %176 = arith.subf %174, %175 : vector<8x128xf32>
    %177 = arith.select %9, %176, %172 : vector<8x128xi1>, vector<8x128xf32>
    %178 = vector.extract_strided_slice %177 {offsets = [0, 0], sizes = [8, 32], strides = [1, 1]} : vector<8x128xf32> to vector<8x32xf32>
    %179 = vector.extract_strided_slice %177 {offsets = [0, 32], sizes = [8, 32], strides = [1, 1]} : vector<8x128xf32> to vector<8x32xf32>
    %180 = vector.extract_strided_slice %177 {offsets = [0, 64], sizes = [8, 32], strides = [1, 1]} : vector<8x128xf32> to vector<8x32xf32>
    %181 = vector.extract_strided_slice %177 {offsets = [0, 96], sizes = [8, 32], strides = [1, 1]} : vector<8x128xf32> to vector<8x32xf32>
    %182 = arith.mulf %179, %159 : vector<8x32xf32>
    %183 = arith.mulf %178, %180 : vector<8x32xf32>
    %184 = arith.addf %182, %183 : vector<8x32xf32>
    %185 = math.tanh %184 : vector<8x32xf32>
    %186 = arith.mulf %181, %185 : vector<8x32xf32>
    %187 = vector.extract_strided_slice %2 {offsets = [56, 0], sizes = [8, 128], strides = [1, 1]} : vector<64x128xf32> to vector<8x128xf32>
    %cst_42 = arith.constant dense<0.000000e+00> : vector<8x128xf32>
    %188 = tpu.matmul %186, %3, %cst_42 {dimension_numbers = #tpu.dot_dimension_numbers<[1], [0], [0], [1], [0, 0, 1, 1], [], []>} : vector<8x32xf32>, vector<32x128xf32>, vector<8x128xf32> -> vector<8x128xf32>
    %189 = arith.addf %187, %188 : vector<8x128xf32>
    %cst_43 = arith.constant 2.000000e+00 : f32
    %190 = vector.broadcast %cst_43 : f32 to vector<8x128xf32>
    %191 = arith.mulf %189, %190 : vector<8x128xf32>
    %192 = arith.select %9, %191, %189 : vector<8x128xi1>, vector<8x128xf32>
    %193 = arith.negf %192 : vector<8x128xf32>
    %194 = math.exp %193 : vector<8x128xf32>
    %cst_44 = arith.constant 1.000000e+00 : f32
    %195 = vector.broadcast %cst_44 : f32 to vector<8x128xf32>
    %196 = arith.addf %195, %194 : vector<8x128xf32>
    %197 = arith.divf %195, %196 : vector<8x128xf32>
    %cst_45 = arith.constant 2.000000e+00 : f32
    %198 = vector.broadcast %cst_45 : f32 to vector<8x128xf32>
    %199 = arith.mulf %197, %198 : vector<8x128xf32>
    %cst_46 = arith.constant 1.000000e+00 : f32
    %200 = vector.broadcast %cst_46 : f32 to vector<8x128xf32>
    %201 = arith.subf %199, %200 : vector<8x128xf32>
    %202 = arith.select %9, %201, %197 : vector<8x128xi1>, vector<8x128xf32>
    %203 = vector.extract_strided_slice %202 {offsets = [0, 0], sizes = [8, 32], strides = [1, 1]} : vector<8x128xf32> to vector<8x32xf32>
    %204 = vector.extract_strided_slice %202 {offsets = [0, 32], sizes = [8, 32], strides = [1, 1]} : vector<8x128xf32> to vector<8x32xf32>
    %205 = vector.extract_strided_slice %202 {offsets = [0, 64], sizes = [8, 32], strides = [1, 1]} : vector<8x128xf32> to vector<8x32xf32>
    %206 = vector.extract_strided_slice %202 {offsets = [0, 96], sizes = [8, 32], strides = [1, 1]} : vector<8x128xf32> to vector<8x32xf32>
    %207 = arith.mulf %204, %184 : vector<8x32xf32>
    %208 = arith.mulf %203, %205 : vector<8x32xf32>
    %209 = arith.addf %207, %208 : vector<8x32xf32>
    %210 = math.tanh %209 : vector<8x32xf32>
    %211 = arith.mulf %206, %210 : vector<8x32xf32>
    %c0_47 = arith.constant 0 : index
    %c0_48 = arith.constant 0 : index
    %212 = vector.load %arg3[%c0_47, %c0_48] : memref<32x128xf32, #tpu.memory_space<vmem>>, vector<32x128xf32>
    %cst_49 = arith.constant dense<0.000000e+00> : vector<8x128xf32>
    %213 = tpu.matmul %211, %212, %cst_49 {dimension_numbers = #tpu.dot_dimension_numbers<[1], [0], [0], [1], [0, 0, 1, 1], [], []>} : vector<8x32xf32>, vector<32x128xf32>, vector<8x128xf32> -> vector<8x128xf32>
    %c0_50 = arith.constant 0 : index
    %c0_51 = arith.constant 0 : index
    %214 = vector.load %arg4[%c0_50, %c0_51] : memref<1x128xf32, #tpu.memory_space<vmem>>, vector<1x128xf32>
    %215 = vector.broadcast %214 : vector<1x128xf32> to vector<8x128xf32>
    %216 = arith.addf %213, %215 : vector<8x128xf32>
    %cst_52 = arith.constant dense<0xFF800000> : vector<8xf32>
    %217 = vector.multi_reduction <maximumf>, %216, %cst_52 [1] : vector<8x128xf32> to vector<8xf32>
    %218 = vector.shape_cast %217 : vector<8xf32> to vector<8x1xf32>
    %219 = vector.broadcast %218 : vector<8x1xf32> to vector<8x128xf32>
    %220 = arith.subf %216, %219 : vector<8x128xf32>
    %221 = math.exp %220 : vector<8x128xf32>
    %cst_53 = arith.constant dense<0.000000e+00> : vector<8xf32>
    %222 = vector.multi_reduction <add>, %221, %cst_53 [1] : vector<8x128xf32> to vector<8xf32>
    %223 = vector.shape_cast %222 : vector<8xf32> to vector<8x1xf32>
    %224 = math.log %223 : vector<8x1xf32>
    %225 = vector.broadcast %224 : vector<8x1xf32> to vector<8x128xf32>
    %226 = arith.subf %220, %225 : vector<8x128xf32>
    %c0_54 = arith.constant 0 : index
    %c0_55 = arith.constant 0 : index
    %227 = vector.load %arg5[%c0_54, %c0_55] : memref<8x128xf32, #tpu.memory_space<vmem>>, vector<8x128xf32>
    tpu.vector_store %arg5[%c0_54, %c0_55], %226 {strides = array<i32>} : memref<8x128xf32, #tpu.memory_space<vmem>>, vector<8x128xf32>,
    return
  }
}

</mosaic_0001>

<llo_original>
// kernel: tpu_custom_call.1
$region0: #{tpu_custom_call.1}
  #allocation0 [shape = 'u32[]', space=smem, size = 0x4, offset = 0x4, fixed_abs, tag = 'smem constant byte address 0x4 - core index']
  #allocation1 [shape = 'u32[144,128]{1,0:T(1,128)}', space=vmem, size = 0x12000, scoped, tag = 'internal scratch']
  %s0 = inlined_call_operand.hbm [shape: f32[64,128], index: 0, kind: input, shape index: {}]
  %s1 = inlined_call_operand.hbm [shape: f32[128,128], index: 1, kind: input, shape index: {}]
  %s2 = inlined_call_operand.hbm [shape: f32[32,128], index: 2, kind: input, shape index: {}]
  %s3 = inlined_call_operand.hbm [shape: f32[32,128], index: 3, kind: input, shape index: {}]
  %s4 = inlined_call_operand.vmem [shape: f32[1,128], index: 4, kind: input, shape index: {}]
  %s5 = inlined_call_operand.hbm [shape: f32[8,128], index: 5, kind: output, shape index: {}]
  %s6 = sld [smem:[#allocation0]]
  $region46: #{tpu_custom_call.1} parent=0
    _
  %s8 = ssub.s32 1, %s6
  %s9 = scalar_select 0, %s8, %s6
  $region1: #{tpu_custom_call.1} parent=0
    #allocation2 [shape = 'u8[32768]{0}', space=vmem, size = 0x8000, scoped, tag = 'input window, operand 0, single buffered']
    #allocation3 [shape = 's32[1]{0}', space=sflag, size = 0x4, scoped, tag = 'scoped memory for tpu_custom_call.1']
    #allocation4 [shape = 's32[1]{0}', space=sflag, size = 0x4, scoped, tag = 'scoped memory for tpu_custom_call.1']
    #allocation5 [shape = 'u8[65536]{0}', space=vmem, size = 0x10000, scoped, tag = 'input window, operand 1, single buffered']
    #allocation6 [shape = 's32[1]{0}', space=sflag, size = 0x4, scoped, tag = 'scoped memory for tpu_custom_call.1']
    #allocation7 [shape = 'u8[16384]{0}', space=vmem, size = 0x4000, scoped, tag = 'input window, operand 2, single buffered']
    #allocation8 [shape = 'u8[16384]{0}', space=vmem, size = 0x4000, scoped, tag = 'input window, operand 3, single buffered']
    #allocation9 [shape = 's32[1]{0}', space=sflag, size = 0x4, scoped, tag = 'scoped memory for tpu_custom_call.1']
    #allocation10 [shape = 'u8[4096]{0}', space=vmem, size = 0x1000, scoped, tag = 'output window, operand 0, single buffered']
    %10 = vsyncpa [#allocation3], 0
    %11 = vsyncpa [#allocation6], 0
    %12 = vsyncpa [#allocation9], 0
    %13 = vsyncpa [#allocation4], 0
    // Predicated region
    $region2: #{tpu_custom_call.1} parent=1 // pred_check
      _
    $region3: #{tpu_custom_call.1} parent=1 // pred_check_branch
      %15 = sbr.rel (0) target = $region5
    $region4: #{tpu_custom_call.1} parent=1 // pred_region
      %s17 = ssub.s32 1024, 1024
      %18 = vsyncadd [#allocation3], %s17
      %s19 = sshll.u32 [#allocation2], 4
      %s20 = int_to_ptr.vmem [resolvable:$true] %s19
      %25 = dma.hbm_to_vmem [thread:$0]  %s0, 1024, %s20, [#allocation3], 128, 128, 8
    $region5: #{tpu_custom_call.1} parent=1 // pred_fallthru
      _
    // Predicated region
    $region6: #{tpu_custom_call.1} parent=1 // pred_check
      _
    $region7: #{tpu_custom_call.1} parent=1 // pred_check_branch
      %27 = sbr.rel (0) target = $region9
    $region8: #{tpu_custom_call.1} parent=1 // pred_region
      %s29 = ssub.s32 2048, 2048
      %30 = vsyncadd [#allocation6], %s29
      %s31 = sshll.u32 [#allocation5], 4
      %s32 = int_to_ptr.vmem [resolvable:$true] %s31
      %37 = dma.hbm_to_vmem [thread:$0]  %s1, 2048, %s32, [#allocation6], 128, 128, 8
    $region9: #{tpu_custom_call.1} parent=1 // pred_fallthru
      _
    // Predicated region
    $region10: #{tpu_custom_call.1} parent=1 // pred_check
      _
    $region11: #{tpu_custom_call.1} parent=1 // pred_check_branch
      %39 = sbr.rel (0) target = $region13
    $region12: #{tpu_custom_call.1} parent=1 // pred_region
      %s41 = ssub.s32 512, 512
      %42 = vsyncadd [#allocation6], %s41
      %s43 = sshll.u32 [#allocation7], 4
      %s44 = int_to_ptr.vmem [resolvable:$true] %s43
      %49 = dma.hbm_to_vmem [thread:$0]  %s2, 512, %s44, [#allocation6], 128, 128, 8
    $region13: #{tpu_custom_call.1} parent=1 // pred_fallthru
      _
    // Predicated region
    $region14: #{tpu_custom_call.1} parent=1 // pred_check
      _
    $region15: #{tpu_custom_call.1} parent=1 // pred_check_branch
      %51 = sbr.rel (0) target = $region17
    $region16: #{tpu_custom_call.1} parent=1 // pred_region
      %s53 = ssub.s32 512, 512
      %54 = vsyncadd [#allocation9], %s53
      %s55 = sshll.u32 [#allocation8], 4
      %s56 = int_to_ptr.vmem [resolvable:$true] %s55
      %61 = dma.hbm_to_vmem [thread:$0]  %s3, 512, %s56, [#allocation9], 128, 128, 8
    $region17: #{tpu_custom_call.1} parent=1 // pred_fallthru
      _
    // Predicated region
    $region18: #{tpu_custom_call.1} parent=1 // pred_check
      _
    $region19: #{tpu_custom_call.1} parent=1 // pred_check_branch
      %63 = sbr.rel (0) target = $region21
    $region20: #{tpu_custom_call.1} parent=1 // pred_region
      _
    $region21: #{tpu_custom_call.1} parent=1 // pred_fallthru
      _
    // Predicated region
    $region22: #{tpu_custom_call.1} parent=1 // pred_check
      _
    $region23: #{tpu_custom_call.1} parent=1 // pred_check_branch
      %65 = sbr.rel (0) target = $region25
    $region24: #{tpu_custom_call.1} parent=1 // pred_region
      %66 = dma.done [#allocation3], 1024
    $region25: #{tpu_custom_call.1} parent=1 // pred_fallthru
      _
    // Predicated region
    $region26: #{tpu_custom_call.1} parent=1 // pred_check
      _
    $region27: #{tpu_custom_call.1} parent=1 // pred_check_branch
      %68 = sbr.rel (0) target = $region29
    $region28: #{tpu_custom_call.1} parent=1 // pred_region
      %69 = dma.done [#allocation6], 2048
    $region29: #{tpu_custom_call.1} parent=1 // pred_fallthru
      _
    // Predicated region
    $region30: #{tpu_custom_call.1} parent=1 // pred_check
      _
    $region31: #{tpu_custom_call.1} parent=1 // pred_check_branch
      %71 = sbr.rel (0) target = $region33
    $region32: #{tpu_custom_call.1} parent=1 // pred_region
      %72 = dma.done [#allocation6], 512
    $region33: #{tpu_custom_call.1} parent=1 // pred_fallthru
      _
    // Predicated region
    $region34: #{tpu_custom_call.1} parent=1 // pred_check
      _
    $region35: #{tpu_custom_call.1} parent=1 // pred_check_branch
      %74 = sbr.rel (0) target = $region37
    $region36: #{tpu_custom_call.1} parent=1 // pred_region
      %75 = dma.done [#allocation9], 512
    $region37: #{tpu_custom_call.1} parent=1 // pred_fallthru
      _
    %v76 = vld [vmem:[#allocation2] sm:$0xff]
    %v77 = vld [vmem:[#allocation2 + $0x8] sm:$0xff]
    %v78 = vld [vmem:[#allocation2 + $0x10] sm:$0xff]
    %v79 = vld [vmem:[#allocation2 + $0x18] sm:$0xff]
    %v80 = vld [vmem:[#allocation2 + $0x20] sm:$0xff]
    %v81 = vld [vmem:[#allocation2 + $0x28] sm:$0xff]
    %v82 = vld [vmem:[#allocation2 + $0x30] sm:$0xff]
    %v83 = vld [vmem:[#allocation2 + $0x38] sm:$0xff]
    %v84 = vld [vmem:[#allocation5] sm:$0xff]
    %v85 = vld [vmem:[#allocation5 + $0x8] sm:$0xff]
    %v86 = vld [vmem:[#allocation5 + $0x10] sm:$0xff]
    %v87 = vld [vmem:[#allocation5 + $0x18] sm:$0xff]
    %v88 = vld [vmem:[#allocation5 + $0x20] sm:$0xff]
    %v89 = vld [vmem:[#allocation5 + $0x28] sm:$0xff]
    %v90 = vld [vmem:[#allocation5 + $0x30] sm:$0xff]
    %v91 = vld [vmem:[#allocation5 + $0x38] sm:$0xff]
    %v92 = vld [vmem:[#allocation5 + $0x40] sm:$0xff]
    %v93 = vld [vmem:[#allocation5 + $0x48] sm:$0xff]
    %v94 = vld [vmem:[#allocation5 + $0x50] sm:$0xff]
    %v95 = vld [vmem:[#allocation5 + $0x58] sm:$0xff]
    %v96 = vld [vmem:[#allocation5 + $0x60] sm:$0xff]
    %v97 = vld [vmem:[#allocation5 + $0x68] sm:$0xff]
    %v98 = vld [vmem:[#allocation5 + $0x70] sm:$0xff]
    %v99 = vld [vmem:[#allocation5 + $0x78] sm:$0xff]
    %100 = vmatprep.subr.mxu0 0.0
    %101 = vmatpush1.msra.mxu0 %v99
    %102 = vmatprep.subr.mxu0 0.0
    %103 = vmatpush1.msra.mxu0 %v98
    %104 = vmatprep.subr.mxu0 0.0
    %105 = vmatpush1.msra.mxu0 %v97
    %106 = vmatprep.subr.mxu0 0.0
    %107 = vmatpush1.msra.mxu0 %v96
    %108 = vmatprep.subr.mxu0 0.0
    %109 = vmatpush1.msra.mxu0 %v95
    %110 = vmatprep.subr.mxu0 0.0
    %111 = vmatpush1.msra.mxu0 %v94
    %112 = vmatprep.subr.mxu0 0.0
    %113 = vmatpush1.msra.mxu0 %v93
    %114 = vmatprep.subr.mxu0 0.0
    %115 = vmatpush1.msra.mxu0 %v92
    %116 = vmatprep.subr.mxu0 0.0
    %117 = vmatpush1.msra.mxu0 %v91
    %118 = vmatprep.subr.mxu0 0.0
    %119 = vmatpush1.msra.mxu0 %v90
    %120 = vmatprep.subr.mxu0 0.0
    %121 = vmatpush1.msra.mxu0 %v89
    %122 = vmatprep.subr.mxu0 0.0
    %123 = vmatpush1.msra.mxu0 %v88
    %124 = vmatprep.subr.mxu0 0.0
    %125 = vmatpush1.msra.mxu0 %v87
    %126 = vmatprep.subr.mxu0 0.0
    %127 = vmatpush1.msra.mxu0 %v86
    %128 = vmatprep.subr.mxu0 0.0
    %129 = vmatpush1.msra.mxu0 %v85
    %130 = vmatprep.subr.mxu0 0.0
    %131 = vmatpush1.msra.mxu0 %v84
    %132 = vmatprep.subr.mxu0 0.0
    %133 = vmatpush2.msra.mxu0 0.0
    %134 = vmatprep.subr.mxu0 0.0
    %135 = vmatpush2.msra.mxu0 0.0
    %136 = vmatprep.subr.mxu0 0.0
    %137 = vmatpush2.msra.mxu0 0.0
    %138 = vmatprep.subr.mxu0 0.0
    %139 = vmatpush2.msra.mxu0 0.0
    %140 = vmatprep.subr.mxu0 0.0
    %141 = vmatpush2.msra.mxu0 0.0
    %142 = vmatprep.subr.mxu0 0.0
    %143 = vmatpush2.msra.mxu0 0.0
    %144 = vmatprep.subr.mxu0 0.0
    %145 = vmatpush2.msra.mxu0 0.0
    %146 = vmatprep.subr.mxu0 0.0
    %147 = vmatpush2.msra.mxu0 0.0
    %148 = vmatprep.subr.mxu0 0.0
    %149 = vmatpush2.msra.mxu0 0.0
    %150 = vmatprep.subr.mxu0 0.0
    %151 = vmatpush2.msra.mxu0 0.0
    %152 = vmatprep.subr.mxu0 0.0
    %153 = vmatpush2.msra.mxu0 0.0
    %154 = vmatprep.subr.mxu0 0.0
    %155 = vmatpush2.msra.mxu0 0.0
    %156 = vmatprep.subr.mxu0 0.0
    %157 = vmatpush2.msra.mxu0 0.0
    %158 = vmatprep.subr.mxu0 0.0
    %159 = vmatpush2.msra.mxu0 0.0
    %160 = vmatprep.subr.mxu0 0.0
    %161 = vmatpush2.msra.mxu0 0.0
    %162 = vmatprep.subr.mxu0 0.0
    %163 = vmatpush2.msra.mxu0 0.0
    %164 = vmatprep.mubr.f32.mxu0 0.0
    %165 = vmatmul.mubr.f32.gmra.mxu0 %v76
    %v166 = vpop.f32.mrf.mxu0
    %v167 = vadd.f32 0.0, %v166
    %v168 = vpop.f32.mrf.mxu0
    %169 = vmatprep.mubr.f32.mxu0 0.0
    %170 = vmatmul.mubr.f32.gmra.mxu0 %v77
    %v171 = vpop.f32.mrf.mxu0
    %v172 = vadd.f32 0.0, %v171
    %v173 = vpop.f32.mrf.mxu0
    %174 = vmatprep.mubr.f32.mxu0 0.0
    %175 = vmatmul.mubr.f32.gmra.mxu0 %v78
    %v176 = vpop.f32.mrf.mxu0
    %v177 = vadd.f32 0.0, %v176
    %v178 = vpop.f32.mrf.mxu0
    %179 = vmatprep.mubr.f32.mxu0 0.0
    %180 = vmatmul.mubr.f32.gmra.mxu0 %v79
    %v181 = vpop.f32.mrf.mxu0
    %v182 = vadd.f32 0.0, %v181
    %v183 = vpop.f32.mrf.mxu0
    %184 = vmatprep.mubr.f32.mxu0 0.0
    %185 = vmatmul.mubr.f32.gmra.mxu0 %v80
    %v186 = vpop.f32.mrf.mxu0
    %v187 = vadd.f32 0.0, %v186
    %v188 = vpop.f32.mrf.mxu0
    %189 = vmatprep.mubr.f32.mxu0 0.0
    %190 = vmatmul.mubr.f32.gmra.mxu0 %v81
    %v191 = vpop.f32.mrf.mxu0
    %v192 = vadd.f32 0.0, %v191
    %v193 = vpop.f32.mrf.mxu0
    %194 = vmatprep.mubr.f32.mxu0 0.0
    %195 = vmatmul.mubr.f32.gmra.mxu0 %v82
    %v196 = vpop.f32.mrf.mxu0
    %v197 = vadd.f32 0.0, %v196
    %v198 = vpop.f32.mrf.mxu0
    %199 = vmatprep.mubr.f32.mxu0 0.0
    %200 = vmatmul.mubr.f32.gmra.mxu0 %v83
    %v201 = vpop.f32.mrf.mxu0
    %v202 = vadd.f32 0.0, %v201
    %v203 = vpop.f32.mrf.mxu0
    %204 = vdwg.mxu0
    %v205 = vld [vmem:[#allocation7] sm:$0xff]
    %v206 = vld [vmem:[#allocation7 + $0x8] sm:$0xff]
    %v207 = vld [vmem:[#allocation7 + $0x10] sm:$0xff]
    %v208 = vld [vmem:[#allocation7 + $0x18] sm:$0xff]
    %v209 = vlaneseq
    %v210 = vand.u32 %v209, 127
    %vm211 = vcmp.ge.s32.totalorder %v210, 64
    %vm212 = vcmp.lt.s32.totalorder %v210, 96
    %vm213 = vmand %vm211, %vm212
    %vm214 = vcmask 261120
    %v216 = vsel %vm214, 0.0, 0
    %218 = vmatprep.subr.mxu0 0.0
    %219 = vmatpush1.msra.mxu0 0.0
    %220 = vmatprep.subr.mxu0 0.0
    %221 = vmatpush1.msra.mxu0 0.0
    %222 = vmatprep.subr.mxu0 0.0
    %223 = vmatpush1.msra.mxu0 0.0
    %224 = vmatprep.subr.mxu0 0.0
    %225 = vmatpush1.msra.mxu0 0.0
    %226 = vmatprep.subr.mxu0 0.0
    %227 = vmatpush1.msra.mxu0 0.0
    %228 = vmatprep.subr.mxu0 0.0
    %229 = vmatpush1.msra.mxu0 0.0
    %230 = vmatprep.subr.mxu0 0.0
    %231 = vmatpush1.msra.mxu0 0.0
    %232 = vmatprep.subr.mxu0 0.0
    %233 = vmatpush1.msra.mxu0 0.0
    %234 = vmatprep.subr.mxu0 0.0
    %235 = vmatpush1.msra.mxu0 0.0
    %236 = vmatprep.subr.mxu0 0.0
    %237 = vmatpush1.msra.mxu0 0.0
    %238 = vmatprep.subr.mxu0 0.0
    %239 = vmatpush1.msra.mxu0 0.0
    %240 = vmatprep.subr.mxu0 0.0
    %241 = vmatpush1.msra.mxu0 0.0
    %242 = vmatprep.subr.mxu0 0.0
    %243 = vmatpush1.msra.mxu0 %v208
    %244 = vmatprep.subr.mxu0 0.0
    %245 = vmatpush1.msra.mxu0 %v207
    %246 = vmatprep.subr.mxu0 0.0
    %247 = vmatpush1.msra.mxu0 %v206
    %248 = vmatprep.subr.mxu0 0.0
    %249 = vmatpush1.msra.mxu0 %v205
    %250 = vmatprep.subr.mxu0 0.0
    %251 = vmatpush2.msra.mxu0 0.0
    %252 = vmatprep.subr.mxu0 0.0
    %253 = vmatpush2.msra.mxu0 0.0
    %254 = vmatprep.subr.mxu0 0.0
    %255 = vmatpush2.msra.mxu0 0.0
    %256 = vmatprep.subr.mxu0 0.0
    %257 = vmatpush2.msra.mxu0 0.0
    %258 = vmatprep.subr.mxu0 0.0
    %259 = vmatpush2.msra.mxu0 0.0
    %260 = vmatprep.subr.mxu0 0.0
    %261 = vmatpush2.msra.mxu0 0.0
    %262 = vmatprep.subr.mxu0 0.0
    %263 = vmatpush2.msra.mxu0 0.0
    %264 = vmatprep.subr.mxu0 0.0
    %265 = vmatpush2.msra.mxu0 0.0
    %266 = vmatprep.subr.mxu0 0.0
    %267 = vmatpush2.msra.mxu0 0.0
    %268 = vmatprep.subr.mxu0 0.0
    %269 = vmatpush2.msra.mxu0 0.0
    %270 = vmatprep.subr.mxu0 0.0
    %271 = vmatpush2.msra.mxu0 0.0
    %272 = vmatprep.subr.mxu0 0.0
    %273 = vmatpush2.msra.mxu0 0.0
    %274 = vmatprep.subr.mxu0 0.0
    %275 = vmatpush2.msra.mxu0 0.0
    %276 = vmatprep.subr.mxu0 0.0
    %277 = vmatpush2.msra.mxu0 0.0
    %278 = vmatprep.subr.mxu0 0.0
    %279 = vmatpush2.msra.mxu0 0.0
    %280 = vmatprep.subr.mxu0 0.0
    %281 = vmatpush2.msra.mxu0 0.0
    %282 = vmatprep.mubr.f32.mxu0 0.0
    %283 = vmatmul.mubr.f32.gmra.mxu0 %v216
    %v284 = vpop.f32.mrf.mxu0
    %v285 = vadd.f32 0.0, %v284
    %v286 = vpop.f32.mrf.mxu0
    %287 = vdwg.mxu0
    %v288 = vadd.f32 %v167, %v285
    %v289 = vmul.f32 %v288, 2.0
    %v290 = vsel %vm213, %v289, %v288
    %v291 = vxor.u32 %v290, 2147483648
    %v292 = vmul.f32 %v291, 1.442695
    %v293 = vpow.pop %v292
    %v294 = vadd.f32 %v293, 1.0
    %v295 = vrcp.pop %v294
    %v296 = vmul.f32 1.0, %v295
    %v297 = vmul.f32 %v296, 2.0
    %v298 = vsub.f32 %v297, 1.0
    %v299 = vsel %vm213, %v298, %v296
    %v300 = vmul.f32 %v299, 0.0
    %302 = vrot.lane.b32.xlu0 %v299, 64
    %v303 = vpop.permute.xlu0 %302
    %v305 = vmul.f32 %v299, %v303
    %307 = vrot.lane.b32.xlu0 %v305, 32
    %v308 = vpop.permute.xlu0 %307
    %v310 = vadd.f32 %v300, %v308
    %v311 = vtanh.pop %v310
    %313 = vrot.lane.b32.xlu0 %v311, 64
    %v314 = vpop.permute.xlu0 %313
    %v316 = vmul.f32 %v299, %v314
    %318 = vrot.lane.b32.xlu0 %v316, 32
    %v319 = vpop.permute.xlu0 %318
    %v320 = vsel %vm214, %v319, 0
    %322 = vmatprep.subr.mxu0 0.0
    %323 = vmatpush1.msra.mxu0 0.0
    %324 = vmatprep.subr.mxu0 0.0
    %325 = vmatpush1.msra.mxu0 0.0
    %326 = vmatprep.subr.mxu0 0.0
    %327 = vmatpush1.msra.mxu0 0.0
    %328 = vmatprep.subr.mxu0 0.0
    %329 = vmatpush1.msra.mxu0 0.0
    %330 = vmatprep.subr.mxu0 0.0
    %331 = vmatpush1.msra.mxu0 0.0
    %332 = vmatprep.subr.mxu0 0.0
    %333 = vmatpush1.msra.mxu0 0.0
    %334 = vmatprep.subr.mxu0 0.0
    %335 = vmatpush1.msra.mxu0 0.0
    %336 = vmatprep.subr.mxu0 0.0
    %337 = vmatpush1.msra.mxu0 0.0
    %338 = vmatprep.subr.mxu0 0.0
    %339 = vmatpush1.msra.mxu0 0.0
    %340 = vmatprep.subr.mxu0 0.0
    %341 = vmatpush1.msra.mxu0 0.0
    %342 = vmatprep.subr.mxu0 0.0
    %343 = vmatpush1.msra.mxu0 0.0
    %344 = vmatprep.subr.mxu0 0.0
    %345 = vmatpush1.msra.mxu0 0.0
    %346 = vmatprep.subr.mxu0 0.0
    %347 = vmatpush1.msra.mxu0 %v208
    %348 = vmatprep.subr.mxu0 0.0
    %349 = vmatpush1.msra.mxu0 %v207
    %350 = vmatprep.subr.mxu0 0.0
    %351 = vmatpush1.msra.mxu0 %v206
    %352 = vmatprep.subr.mxu0 0.0
    %353 = vmatpush1.msra.mxu0 %v205
    %354 = vmatprep.subr.mxu0 0.0
    %355 = vmatpush2.msra.mxu0 0.0
    %356 = vmatprep.subr.mxu0 0.0
    %357 = vmatpush2.msra.mxu0 0.0
    %358 = vmatprep.subr.mxu0 0.0
    %359 = vmatpush2.msra.mxu0 0.0
    %360 = vmatprep.subr.mxu0 0.0
    %361 = vmatpush2.msra.mxu0 0.0
    %362 = vmatprep.subr.mxu0 0.0
    %363 = vmatpush2.msra.mxu0 0.0
    %364 = vmatprep.subr.mxu0 0.0
    %365 = vmatpush2.msra.mxu0 0.0
    %366 = vmatprep.subr.mxu0 0.0
    %367 = vmatpush2.msra.mxu0 0.0
    %368 = vmatprep.subr.mxu0 0.0
    %369 = vmatpush2.msra.mxu0 0.0
    %370 = vmatprep.subr.mxu0 0.0
    %371 = vmatpush2.msra.mxu0 0.0
    %372 = vmatprep.subr.mxu0 0.0
    %373 = vmatpush2.msra.mxu0 0.0
    %374 = vmatprep.subr.mxu0 0.0
    %375 = vmatpush2.msra.mxu0 0.0
    %376 = vmatprep.subr.mxu0 0.0
    %377 = vmatpush2.msra.mxu0 0.0
    %378 = vmatprep.subr.mxu0 0.0
    %379 = vmatpush2.msra.mxu0 0.0
    %380 = vmatprep.subr.mxu0 0.0
    %381 = vmatpush2.msra.mxu0 0.0
    %382 = vmatprep.subr.mxu0 0.0
    %383 = vmatpush2.msra.mxu0 0.0
    %384 = vmatprep.subr.mxu0 0.0
    %385 = vmatpush2.msra.mxu0 0.0
    %386 = vmatprep.mubr.f32.mxu0 0.0
    %387 = vmatmul.mubr.f32.gmra.mxu0 %v320
    %v388 = vpop.f32.mrf.mxu0
    %v389 = vadd.f32 0.0, %v388
    %v390 = vpop.f32.mrf.mxu0
    %391 = vdwg.mxu0
    %v392 = vadd.f32 %v172, %v389
    %v393 = vmul.f32 %v392, 2.0
    %v394 = vsel %vm213, %v393, %v392
    %v395 = vxor.u32 %v394, 2147483648
    %v396 = vmul.f32 %v395, 1.442695
    %v397 = vpow.pop %v396
    %v398 = vadd.f32 %v397, 1.0
    %v399 = vrcp.pop %v398
    %v400 = vmul.f32 1.0, %v399
    %v401 = vmul.f32 %v400, 2.0
    %v402 = vsub.f32 %v401, 1.0
    %v403 = vsel %vm213, %v402, %v400
    %v404 = vmul.f32 %v403, %v310
    %406 = vrot.lane.b32.xlu0 %v403, 64
    %v407 = vpop.permute.xlu0 %406
    %v409 = vmul.f32 %v403, %v407
    %411 = vrot.lane.b32.xlu0 %v409, 32
    %v412 = vpop.permute.xlu0 %411
    %v414 = vadd.f32 %v404, %v412
    %v415 = vtanh.pop %v414
    %417 = vrot.lane.b32.xlu0 %v415, 64
    %v418 = vpop.permute.xlu0 %417
    %v420 = vmul.f32 %v403, %v418
    %422 = vrot.lane.b32.xlu0 %v420, 32
    %v423 = vpop.permute.xlu0 %422
    %v424 = vsel %vm214, %v423, 0
    %426 = vmatprep.subr.mxu0 0.0
    %427 = vmatpush1.msra.mxu0 0.0
    %428 = vmatprep.subr.mxu0 0.0
    %429 = vmatpush1.msra.mxu0 0.0
    %430 = vmatprep.subr.mxu0 0.0
    %431 = vmatpush1.msra.mxu0 0.0
    %432 = vmatprep.subr.mxu0 0.0
    %433 = vmatpush1.msra.mxu0 0.0
    %434 = vmatprep.subr.mxu0 0.0
    %435 = vmatpush1.msra.mxu0 0.0
    %436 = vmatprep.subr.mxu0 0.0
    %437 = vmatpush1.msra.mxu0 0.0
    %438 = vmatprep.subr.mxu0 0.0
    %439 = vmatpush1.msra.mxu0 0.0
    %440 = vmatprep.subr.mxu0 0.0
    %441 = vmatpush1.msra.mxu0 0.0
    %442 = vmatprep.subr.mxu0 0.0
    %443 = vmatpush1.msra.mxu0 0.0
    %444 = vmatprep.subr.mxu0 0.0
    %445 = vmatpush1.msra.mxu0 0.0
    %446 = vmatprep.subr.mxu0 0.0
    %447 = vmatpush1.msra.mxu0 0.0
    %448 = vmatprep.subr.mxu0 0.0
    %449 = vmatpush1.msra.mxu0 0.0
    %450 = vmatprep.subr.mxu0 0.0
    %451 = vmatpush1.msra.mxu0 %v208
    %452 = vmatprep.subr.mxu0 0.0
    %453 = vmatpush1.msra.mxu0 %v207
    %454 = vmatprep.subr.mxu0 0.0
    %455 = vmatpush1.msra.mxu0 %v206
    %456 = vmatprep.subr.mxu0 0.0
    %457 = vmatpush1.msra.mxu0 %v205
    %458 = vmatprep.subr.mxu0 0.0
    %459 = vmatpush2.msra.mxu0 0.0
    %460 = vmatprep.subr.mxu0 0.0
    %461 = vmatpush2.msra.mxu0 0.0
    %462 = vmatprep.subr.mxu0 0.0
    %463 = vmatpush2.msra.mxu0 0.0
    %464 = vmatprep.subr.mxu0 0.0
    %465 = vmatpush2.msra.mxu0 0.0
    %466 = vmatprep.subr.mxu0 0.0
    %467 = vmatpush2.msra.mxu0 0.0
    %468 = vmatprep.subr.mxu0 0.0
    %469 = vmatpush2.msra.mxu0 0.0
    %470 = vmatprep.subr.mxu0 0.0
    %471 = vmatpush2.msra.mxu0 0.0
    %472 = vmatprep.subr.mxu0 0.0
    %473 = vmatpush2.msra.mxu0 0.0
    %474 = vmatprep.subr.mxu0 0.0
    %475 = vmatpush2.msra.mxu0 0.0
    %476 = vmatprep.subr.mxu0 0.0
    %477 = vmatpush2.msra.mxu0 0.0
    %478 = vmatprep.subr.mxu0 0.0
    %479 = vmatpush2.msra.mxu0 0.0
    %480 = vmatprep.subr.mxu0 0.0
    %481 = vmatpush2.msra.mxu0 0.0
    %482 = vmatprep.subr.mxu0 0.0
    %483 = vmatpush2.msra.mxu0 0.0
    %484 = vmatprep.subr.mxu0 0.0
    %485 = vmatpush2.msra.mxu0 0.0
    %486 = vmatprep.subr.mxu0 0.0
    %487 = vmatpush2.msra.mxu0 0.0
    %488 = vmatprep.subr.mxu0 0.0
    %489 = vmatpush2.msra.mxu0 0.0
    %490 = vmatprep.mubr.f32.mxu0 0.0
    %491 = vmatmul.mubr.f32.gmra.mxu0 %v424
    %v492 = vpop.f32.mrf.mxu0
    %v493 = vadd.f32 0.0, %v492
    %v494 = vpop.f32.mrf.mxu0
    %495 = vdwg.mxu0
    %v496 = vadd.f32 %v177, %v493
    %v497 = vmul.f32 %v496, 2.0
    %v498 = vsel %vm213, %v497, %v496
    %v499 = vxor.u32 %v498, 2147483648
    %v500 = vmul.f32 %v499, 1.442695
    %v501 = vpow.pop %v500
    %v502 = vadd.f32 %v501, 1.0
    %v503 = vrcp.pop %v502
    %v504 = vmul.f32 1.0, %v503
    %v505 = vmul.f32 %v504, 2.0
    %v506 = vsub.f32 %v505, 1.0
    %v507 = vsel %vm213, %v506, %v504
    %v508 = vmul.f32 %v507, %v414
    %510 = vrot.lane.b32.xlu0 %v507, 64
    %v511 = vpop.permute.xlu0 %510
    %v513 = vmul.f32 %v507, %v511
    %515 = vrot.lane.b32.xlu0 %v513, 32
    %v516 = vpop.permute.xlu0 %515
    %v518 = vadd.f32 %v508, %v516
    %v519 = vtanh.pop %v518
    %521 = vrot.lane.b32.xlu0 %v519, 64
    %v522 = vpop.permute.xlu0 %521
    %v524 = vmul.f32 %v507, %v522
    %526 = vrot.lane.b32.xlu0 %v524, 32
    %v527 = vpop.permute.xlu0 %526
    %v528 = vsel %vm214, %v527, 0
    %530 = vmatprep.subr.mxu0 0.0
    %531 = vmatpush1.msra.mxu0 0.0
    %532 = vmatprep.subr.mxu0 0.0
    %533 = vmatpush1.msra.mxu0 0.0
    %534 = vmatprep.subr.mxu0 0.0
    %535 = vmatpush1.msra.mxu0 0.0
    %536 = vmatprep.subr.mxu0 0.0
    %537 = vmatpush1.msra.mxu0 0.0
    %538 = vmatprep.subr.mxu0 0.0
    %539 = vmatpush1.msra.mxu0 0.0
    %540 = vmatprep.subr.mxu0 0.0
    %541 = vmatpush1.msra.mxu0 0.0
    %542 = vmatprep.subr.mxu0 0.0
    %543 = vmatpush1.msra.mxu0 0.0
    %544 = vmatprep.subr.mxu0 0.0
    %545 = vmatpush1.msra.mxu0 0.0
    %546 = vmatprep.subr.mxu0 0.0
    %547 = vmatpush1.msra.mxu0 0.0
    %548 = vmatprep.subr.mxu0 0.0
    %549 = vmatpush1.msra.mxu0 0.0
    %550 = vmatprep.subr.mxu0 0.0
    %551 = vmatpush1.msra.mxu0 0.0
    %552 = vmatprep.subr.mxu0 0.0
    %553 = vmatpush1.msra.mxu0 0.0
    %554 = vmatprep.subr.mxu0 0.0
    %555 = vmatpush1.msra.mxu0 %v208
    %556 = vmatprep.subr.mxu0 0.0
    %557 = vmatpush1.msra.mxu0 %v207
    %558 = vmatprep.subr.mxu0 0.0
    %559 = vmatpush1.msra.mxu0 %v206
    %560 = vmatprep.subr.mxu0 0.0
    %561 = vmatpush1.msra.mxu0 %v205
    %562 = vmatprep.subr.mxu0 0.0
    %563 = vmatpush2.msra.mxu0 0.0
    %564 = vmatprep.subr.mxu0 0.0
    %565 = vmatpush2.msra.mxu0 0.0
    %566 = vmatprep.subr.mxu0 0.0
    %567 = vmatpush2.msra.mxu0 0.0
    %568 = vmatprep.subr.mxu0 0.0
    %569 = vmatpush2.msra.mxu0 0.0
    %570 = vmatprep.subr.mxu0 0.0
    %571 = vmatpush2.msra.mxu0 0.0
    %572 = vmatprep.subr.mxu0 0.0
    %573 = vmatpush2.msra.mxu0 0.0
    %574 = vmatprep.subr.mxu0 0.0
    %575 = vmatpush2.msra.mxu0 0.0
    %576 = vmatprep.subr.mxu0 0.0
    %577 = vmatpush2.msra.mxu0 0.0
    %578 = vmatprep.subr.mxu0 0.0
    %579 = vmatpush2.msra.mxu0 0.0
    %580 = vmatprep.subr.mxu0 0.0
    %581 = vmatpush2.msra.mxu0 0.0
    %582 = vmatprep.subr.mxu0 0.0
    %583 = vmatpush2.msra.mxu0 0.0
    %584 = vmatprep.subr.mxu0 0.0
    %585 = vmatpush2.msra.mxu0 0.0
    %586 = vmatprep.subr.mxu0 0.0
    %587 = vmatpush2.msra.mxu0 0.0
    %588 = vmatprep.subr.mxu0 0.0
    %589 = vmatpush2.msra.mxu0 0.0
    %590 = vmatprep.subr.mxu0 0.0
    %591 = vmatpush2.msra.mxu0 0.0
    %592 = vmatprep.subr.mxu0 0.0
    %593 = vmatpush2.msra.mxu0 0.0
    %594 = vmatprep.mubr.f32.mxu0 0.0
    %595 = vmatmul.mubr.f32.gmra.mxu0 %v528
    %v596 = vpop.f32.mrf.mxu0
    %v597 = vadd.f32 0.0, %v596
    %v598 = vpop.f32.mrf.mxu0
    %599 = vdwg.mxu0
    %v600 = vadd.f32 %v182, %v597
    %v601 = vmul.f32 %v600, 2.0
    %v602 = vsel %vm213, %v601, %v600
    %v603 = vxor.u32 %v602, 2147483648
    %v604 = vmul.f32 %v603, 1.442695
    %v605 = vpow.pop %v604
    %v606 = vadd.f32 %v605, 1.0
    %v607 = vrcp.pop %v606
    %v608 = vmul.f32 1.0, %v607
    %v609 = vmul.f32 %v608, 2.0
    %v610 = vsub.f32 %v609, 1.0
    %v611 = vsel %vm213, %v610, %v608
    %v612 = vmul.f32 %v611, %v518
    %614 = vrot.lane.b32.xlu0 %v611, 64
    %v615 = vpop.permute.xlu0 %614
    %v617 = vmul.f32 %v611, %v615
    %619 = vrot.lane.b32.xlu0 %v617, 32
    %v620 = vpop.permute.xlu0 %619
    %v622 = vadd.f32 %v612, %v620
    %v623 = vtanh.pop %v622
    %625 = vrot.lane.b32.xlu0 %v623, 64
    %v626 = vpop.permute.xlu0 %625
    %v628 = vmul.f32 %v611, %v626
    %630 = vrot.lane.b32.xlu0 %v628, 32
    %v631 = vpop.permute.xlu0 %630
    %v632 = vsel %vm214, %v631, 0
    %634 = vmatprep.subr.mxu0 0.0
    %635 = vmatpush1.msra.mxu0 0.0
    %636 = vmatprep.subr.mxu0 0.0
    %637 = vmatpush1.msra.mxu0 0.0
    %638 = vmatprep.subr.mxu0 0.0
    %639 = vmatpush1.msra.mxu0 0.0
    %640 = vmatprep.subr.mxu0 0.0
    %641 = vmatpush1.msra.mxu0 0.0
    %642 = vmatprep.subr.mxu0 0.0
    %643 = vmatpush1.msra.mxu0 0.0
    %644 = vmatprep.subr.mxu0 0.0
    %645 = vmatpush1.msra.mxu0 0.0
    %646 = vmatprep.subr.mxu0 0.0
    %647 = vmatpush1.msra.mxu0 0.0
    %648 = vmatprep.subr.mxu0 0.0
    %649 = vmatpush1.msra.mxu0 0.0
    %650 = vmatprep.subr.mxu0 0.0
    %651 = vmatpush1.msra.mxu0 0.0
    %652 = vmatprep.subr.mxu0 0.0
    %653 = vmatpush1.msra.mxu0 0.0
    %654 = vmatprep.subr.mxu0 0.0
    %655 = vmatpush1.msra.mxu0 0.0
    %656 = vmatprep.subr.mxu0 0.0
    %657 = vmatpush1.msra.mxu0 0.0
    %658 = vmatprep.subr.mxu0 0.0
    %659 = vmatpush1.msra.mxu0 %v208
    %660 = vmatprep.subr.mxu0 0.0
    %661 = vmatpush1.msra.mxu0 %v207
    %662 = vmatprep.subr.mxu0 0.0
    %663 = vmatpush1.msra.mxu0 %v206
    %664 = vmatprep.subr.mxu0 0.0
    %665 = vmatpush1.msra.mxu0 %v205
    %666 = vmatprep.subr.mxu0 0.0
    %667 = vmatpush2.msra.mxu0 0.0
    %668 = vmatprep.subr.mxu0 0.0
    %669 = vmatpush2.msra.mxu0 0.0
    %670 = vmatprep.subr.mxu0 0.0
    %671 = vmatpush2.msra.mxu0 0.0
    %672 = vmatprep.subr.mxu0 0.0
    %673 = vmatpush2.msra.mxu0 0.0
    %674 = vmatprep.subr.mxu0 0.0
    %675 = vmatpush2.msra.mxu0 0.0
    %676 = vmatprep.subr.mxu0 0.0
    %677 = vmatpush2.msra.mxu0 0.0
    %678 = vmatprep.subr.mxu0 0.0
    %679 = vmatpush2.msra.mxu0 0.0
    %680 = vmatprep.subr.mxu0 0.0
    %681 = vmatpush2.msra.mxu0 0.0
    %682 = vmatprep.subr.mxu0 0.0
    %683 = vmatpush2.msra.mxu0 0.0
    %684 = vmatprep.subr.mxu0 0.0
    %685 = vmatpush2.msra.mxu0 0.0
    %686 = vmatprep.subr.mxu0 0.0
    %687 = vmatpush2.msra.mxu0 0.0
    %688 = vmatprep.subr.mxu0 0.0
    %689 = vmatpush2.msra.mxu0 0.0
    %690 = vmatprep.subr.mxu0 0.0
    %691 = vmatpush2.msra.mxu0 0.0
    %692 = vmatprep.subr.mxu0 0.0
    %693 = vmatpush2.msra.mxu0 0.0
    %694 = vmatprep.subr.mxu0 0.0
    %695 = vmatpush2.msra.mxu0 0.0
    %696 = vmatprep.subr.mxu0 0.0
    %697 = vmatpush2.msra.mxu0 0.0
    %698 = vmatprep.mubr.f32.mxu0 0.0
    %699 = vmatmul.mubr.f32.gmra.mxu0 %v632
    %v700 = vpop.f32.mrf.mxu0
    %v701 = vadd.f32 0.0, %v700
    %v702 = vpop.f32.mrf.mxu0
    %703 = vdwg.mxu0
    %v704 = vadd.f32 %v187, %v701
    %v705 = vmul.f32 %v704, 2.0
    %v706 = vsel %vm213, %v705, %v704
    %v707 = vxor.u32 %v706, 2147483648
    %v708 = vmul.f32 %v707, 1.442695
    %v709 = vpow.pop %v708
    %v710 = vadd.f32 %v709, 1.0
    %v711 = vrcp.pop %v710
    %v712 = vmul.f32 1.0, %v711
    %v713 = vmul.f32 %v712, 2.0
    %v714 = vsub.f32 %v713, 1.0
    %v715 = vsel %vm213, %v714, %v712
    %v716 = vmul.f32 %v715, %v622
    %718 = vrot.lane.b32.xlu0 %v715, 64
    %v719 = vpop.permute.xlu0 %718
    %v721 = vmul.f32 %v715, %v719
    %723 = vrot.lane.b32.xlu0 %v721, 32
    %v724 = vpop.permute.xlu0 %723
    %v726 = vadd.f32 %v716, %v724
    %v727 = vtanh.pop %v726
    %729 = vrot.lane.b32.xlu0 %v727, 64
    %v730 = vpop.permute.xlu0 %729
    %v732 = vmul.f32 %v715, %v730
    %734 = vrot.lane.b32.xlu0 %v732, 32
    %v735 = vpop.permute.xlu0 %734
    %v736 = vsel %vm214, %v735, 0
    %738 = vmatprep.subr.mxu0 0.0
    %739 = vmatpush1.msra.mxu0 0.0
    %740 = vmatprep.subr.mxu0 0.0
    %741 = vmatpush1.msra.mxu0 0.0
    %742 = vmatprep.subr.mxu0 0.0
    %743 = vmatpush1.msra.mxu0 0.0
    %744 = vmatprep.subr.mxu0 0.0
    %745 = vmatpush1.msra.mxu0 0.0
    %746 = vmatprep.subr.mxu0 0.0
    %747 = vmatpush1.msra.mxu0 0.0
    %748 = vmatprep.subr.mxu0 0.0
    %749 = vmatpush1.msra.mxu0 0.0
    %750 = vmatprep.subr.mxu0 0.0
    %751 = vmatpush1.msra.mxu0 0.0
    %752 = vmatprep.subr.mxu0 0.0
    %753 = vmatpush1.msra.mxu0 0.0
    %754 = vmatprep.subr.mxu0 0.0
    %755 = vmatpush1.msra.mxu0 0.0
    %756 = vmatprep.subr.mxu0 0.0
    %757 = vmatpush1.msra.mxu0 0.0
    %758 = vmatprep.subr.mxu0 0.0
    %759 = vmatpush1.msra.mxu0 0.0
    %760 = vmatprep.subr.mxu0 0.0
    %761 = vmatpush1.msra.mxu0 0.0
    %762 = vmatprep.subr.mxu0 0.0
    %763 = vmatpush1.msra.mxu0 %v208
    %764 = vmatprep.subr.mxu0 0.0
    %765 = vmatpush1.msra.mxu0 %v207
    %766 = vmatprep.subr.mxu0 0.0
    %767 = vmatpush1.msra.mxu0 %v206
    %768 = vmatprep.subr.mxu0 0.0
    %769 = vmatpush1.msra.mxu0 %v205
    %770 = vmatprep.subr.mxu0 0.0
    %771 = vmatpush2.msra.mxu0 0.0
    %772 = vmatprep.subr.mxu0 0.0
    %773 = vmatpush2.msra.mxu0 0.0
    %774 = vmatprep.subr.mxu0 0.0
    %775 = vmatpush2.msra.mxu0 0.0
    %776 = vmatprep.subr.mxu0 0.0
    %777 = vmatpush2.msra.mxu0 0.0
    %778 = vmatprep.subr.mxu0 0.0
    %779 = vmatpush2.msra.mxu0 0.0
    %780 = vmatprep.subr.mxu0 0.0
    %781 = vmatpush2.msra.mxu0 0.0
    %782 = vmatprep.subr.mxu0 0.0
    %783 = vmatpush2.msra.mxu0 0.0
    %784 = vmatprep.subr.mxu0 0.0
    %785 = vmatpush2.msra.mxu0 0.0
    %786 = vmatprep.subr.mxu0 0.0
    %787 = vmatpush2.msra.mxu0 0.0
    %788 = vmatprep.subr.mxu0 0.0
    %789 = vmatpush2.msra.mxu0 0.0
    %790 = vmatprep.subr.mxu0 0.0
    %791 = vmatpush2.msra.mxu0 0.0
    %792 = vmatprep.subr.mxu0 0.0
    %793 = vmatpush2.msra.mxu0 0.0
    %794 = vmatprep.subr.mxu0 0.0
    %795 = vmatpush2.msra.mxu0 0.0
    %796 = vmatprep.subr.mxu0 0.0
    %797 = vmatpush2.msra.mxu0 0.0
    %798 = vmatprep.subr.mxu0 0.0
    %799 = vmatpush2.msra.mxu0 0.0
    %800 = vmatprep.subr.mxu0 0.0
    %801 = vmatpush2.msra.mxu0 0.0
    %802 = vmatprep.mubr.f32.mxu0 0.0
    %803 = vmatmul.mubr.f32.gmra.mxu0 %v736
    %v804 = vpop.f32.mrf.mxu0
    %v805 = vadd.f32 0.0, %v804
    %v806 = vpop.f32.mrf.mxu0
    %807 = vdwg.mxu0
    %v808 = vadd.f32 %v192, %v805
    %v809 = vmul.f32 %v808, 2.0
    %v810 = vsel %vm213, %v809, %v808
    %v811 = vxor.u32 %v810, 2147483648
    %v812 = vmul.f32 %v811, 1.442695
    %v813 = vpow.pop %v812
    %v814 = vadd.f32 %v813, 1.0
    %v815 = vrcp.pop %v814
    %v816 = vmul.f32 1.0, %v815
    %v817 = vmul.f32 %v816, 2.0
    %v818 = vsub.f32 %v817, 1.0
    %v819 = vsel %vm213, %v818, %v816
    %v820 = vmul.f32 %v819, %v726
    %822 = vrot.lane.b32.xlu0 %v819, 64
    %v823 = vpop.permute.xlu0 %822
    %v825 = vmul.f32 %v819, %v823
    %827 = vrot.lane.b32.xlu0 %v825, 32
    %v828 = vpop.permute.xlu0 %827
    %v830 = vadd.f32 %v820, %v828
    %v831 = vtanh.pop %v830
    %833 = vrot.lane.b32.xlu0 %v831, 64
    %v834 = vpop.permute.xlu0 %833
    %v836 = vmul.f32 %v819, %v834
    %838 = vrot.lane.b32.xlu0 %v836, 32
    %v839 = vpop.permute.xlu0 %838
    %v840 = vsel %vm214, %v839, 0
    %842 = vmatprep.subr.mxu0 0.0
    %843 = vmatpush1.msra.mxu0 0.0
    %844 = vmatprep.subr.mxu0 0.0
    %845 = vmatpush1.msra.mxu0 0.0
    %846 = vmatprep.subr.mxu0 0.0
    %847 = vmatpush1.msra.mxu0 0.0
    %848 = vmatprep.subr.mxu0 0.0
    %849 = vmatpush1.msra.mxu0 0.0
    %850 = vmatprep.subr.mxu0 0.0
    %851 = vmatpush1.msra.mxu0 0.0
    %852 = vmatprep.subr.mxu0 0.0
    %853 = vmatpush1.msra.mxu0 0.0
    %854 = vmatprep.subr.mxu0 0.0
    %855 = vmatpush1.msra.mxu0 0.0
    %856 = vmatprep.subr.mxu0 0.0
    %857 = vmatpush1.msra.mxu0 0.0
    %858 = vmatprep.subr.mxu0 0.0
    %859 = vmatpush1.msra.mxu0 0.0
    %860 = vmatprep.subr.mxu0 0.0
    %861 = vmatpush1.msra.mxu0 0.0
    %862 = vmatprep.subr.mxu0 0.0
    %863 = vmatpush1.msra.mxu0 0.0
    %864 = vmatprep.subr.mxu0 0.0
    %865 = vmatpush1.msra.mxu0 0.0
    %866 = vmatprep.subr.mxu0 0.0
    %867 = vmatpush1.msra.mxu0 %v208
    %868 = vmatprep.subr.mxu0 0.0
    %869 = vmatpush1.msra.mxu0 %v207
    %870 = vmatprep.subr.mxu0 0.0
    %871 = vmatpush1.msra.mxu0 %v206
    %872 = vmatprep.subr.mxu0 0.0
    %873 = vmatpush1.msra.mxu0 %v205
    %874 = vmatprep.subr.mxu0 0.0
    %875 = vmatpush2.msra.mxu0 0.0
    %876 = vmatprep.subr.mxu0 0.0
    %877 = vmatpush2.msra.mxu0 0.0
    %878 = vmatprep.subr.mxu0 0.0
    %879 = vmatpush2.msra.mxu0 0.0
    %880 = vmatprep.subr.mxu0 0.0
    %881 = vmatpush2.msra.mxu0 0.0
    %882 = vmatprep.subr.mxu0 0.0
    %883 = vmatpush2.msra.mxu0 0.0
    %884 = vmatprep.subr.mxu0 0.0
    %885 = vmatpush2.msra.mxu0 0.0
    %886 = vmatprep.subr.mxu0 0.0
    %887 = vmatpush2.msra.mxu0 0.0
    %888 = vmatprep.subr.mxu0 0.0
    %889 = vmatpush2.msra.mxu0 0.0
    %890 = vmatprep.subr.mxu0 0.0
    %891 = vmatpush2.msra.mxu0 0.0
    %892 = vmatprep.subr.mxu0 0.0
    %893 = vmatpush2.msra.mxu0 0.0
    %894 = vmatprep.subr.mxu0 0.0
    %895 = vmatpush2.msra.mxu0 0.0
    %896 = vmatprep.subr.mxu0 0.0
    %897 = vmatpush2.msra.mxu0 0.0
    %898 = vmatprep.subr.mxu0 0.0
    %899 = vmatpush2.msra.mxu0 0.0
    %900 = vmatprep.subr.mxu0 0.0
    %901 = vmatpush2.msra.mxu0 0.0
    %902 = vmatprep.subr.mxu0 0.0
    %903 = vmatpush2.msra.mxu0 0.0
    %904 = vmatprep.subr.mxu0 0.0
    %905 = vmatpush2.msra.mxu0 0.0
    %906 = vmatprep.mubr.f32.mxu0 0.0
    %907 = vmatmul.mubr.f32.gmra.mxu0 %v840
    %v908 = vpop.f32.mrf.mxu0
    %v909 = vadd.f32 0.0, %v908
    %v910 = vpop.f32.mrf.mxu0
    %911 = vdwg.mxu0
    %v912 = vadd.f32 %v197, %v909
    %v913 = vmul.f32 %v912, 2.0
    %v914 = vsel %vm213, %v913, %v912
    %v915 = vxor.u32 %v914, 2147483648
    %v916 = vmul.f32 %v915, 1.442695
    %v917 = vpow.pop %v916
    %v918 = vadd.f32 %v917, 1.0
    %v919 = vrcp.pop %v918
    %v920 = vmul.f32 1.0, %v919
    %v921 = vmul.f32 %v920, 2.0
    %v922 = vsub.f32 %v921, 1.0
    %v923 = vsel %vm213, %v922, %v920
    %v924 = vmul.f32 %v923, %v830
    %926 = vrot.lane.b32.xlu0 %v923, 64
    %v927 = vpop.permute.xlu0 %926
    %v929 = vmul.f32 %v923, %v927
    %931 = vrot.lane.b32.xlu0 %v929, 32
    %v932 = vpop.permute.xlu0 %931
    %v934 = vadd.f32 %v924, %v932
    %v935 = vtanh.pop %v934
    %937 = vrot.lane.b32.xlu0 %v935, 64
    %v938 = vpop.permute.xlu0 %937
    %v940 = vmul.f32 %v923, %v938
    %942 = vrot.lane.b32.xlu0 %v940, 32
    %v943 = vpop.permute.xlu0 %942
    %v944 = vsel %vm214, %v943, 0
    %946 = vmatprep.subr.mxu0 0.0
    %947 = vmatpush1.msra.mxu0 0.0
    %948 = vmatprep.subr.mxu0 0.0
    %949 = vmatpush1.msra.mxu0 0.0
    %950 = vmatprep.subr.mxu0 0.0
    %951 = vmatpush1.msra.mxu0 0.0
    %952 = vmatprep.subr.mxu0 0.0
    %953 = vmatpush1.msra.mxu0 0.0
    %954 = vmatprep.subr.mxu0 0.0
    %955 = vmatpush1.msra.mxu0 0.0
    %956 = vmatprep.subr.mxu0 0.0
    %957 = vmatpush1.msra.mxu0 0.0
    %958 = vmatprep.subr.mxu0 0.0
    %959 = vmatpush1.msra.mxu0 0.0
    %960 = vmatprep.subr.mxu0 0.0
    %961 = vmatpush1.msra.mxu0 0.0
    %962 = vmatprep.subr.mxu0 0.0
    %963 = vmatpush1.msra.mxu0 0.0
    %964 = vmatprep.subr.mxu0 0.0
    %965 = vmatpush1.msra.mxu0 0.0
    %966 = vmatprep.subr.mxu0 0.0
    %967 = vmatpush1.msra.mxu0 0.0
    %968 = vmatprep.subr.mxu0 0.0
    %969 = vmatpush1.msra.mxu0 0.0
    %970 = vmatprep.subr.mxu0 0.0
    %971 = vmatpush1.msra.mxu0 %v208
    %972 = vmatprep.subr.mxu0 0.0
    %973 = vmatpush1.msra.mxu0 %v207
    %974 = vmatprep.subr.mxu0 0.0
    %975 = vmatpush1.msra.mxu0 %v206
    %976 = vmatprep.subr.mxu0 0.0
    %977 = vmatpush1.msra.mxu0 %v205
    %978 = vmatprep.subr.mxu0 0.0
    %979 = vmatpush2.msra.mxu0 0.0
    %980 = vmatprep.subr.mxu0 0.0
    %981 = vmatpush2.msra.mxu0 0.0
    %982 = vmatprep.subr.mxu0 0.0
    %983 = vmatpush2.msra.mxu0 0.0
    %984 = vmatprep.subr.mxu0 0.0
    %985 = vmatpush2.msra.mxu0 0.0
    %986 = vmatprep.subr.mxu0 0.0
    %987 = vmatpush2.msra.mxu0 0.0
    %988 = vmatprep.subr.mxu0 0.0
    %989 = vmatpush2.msra.mxu0 0.0
    %990 = vmatprep.subr.mxu0 0.0
    %991 = vmatpush2.msra.mxu0 0.0
    %992 = vmatprep.subr.mxu0 0.0
    %993 = vmatpush2.msra.mxu0 0.0
    %994 = vmatprep.subr.mxu0 0.0
    %995 = vmatpush2.msra.mxu0 0.0
    %996 = vmatprep.subr.mxu0 0.0
    %997 = vmatpush2.msra.mxu0 0.0
    %998 = vmatprep.subr.mxu0 0.0
    %999 = vmatpush2.msra.mxu0 0.0
    %1000 = vmatprep.subr.mxu0 0.0
    %1001 = vmatpush2.msra.mxu0 0.0
    %1002 = vmatprep.subr.mxu0 0.0
    %1003 = vmatpush2.msra.mxu0 0.0
    %1004 = vmatprep.subr.mxu0 0.0
    %1005 = vmatpush2.msra.mxu0 0.0
    %1006 = vmatprep.subr.mxu0 0.0
    %1007 = vmatpush2.msra.mxu0 0.0
    %1008 = vmatprep.subr.mxu0 0.0
    %1009 = vmatpush2.msra.mxu0 0.0
    %1010 = vmatprep.mubr.f32.mxu0 0.0
    %1011 = vmatmul.mubr.f32.gmra.mxu0 %v944
    %v1012 = vpop.f32.mrf.mxu0
    %v1013 = vadd.f32 0.0, %v1012
    %v1014 = vpop.f32.mrf.mxu0
    %1015 = vdwg.mxu0
    %v1016 = vadd.f32 %v202, %v1013
    %v1017 = vmul.f32 %v1016, 2.0
    %v1018 = vsel %vm213, %v1017, %v1016
    %v1019 = vxor.u32 %v1018, 2147483648
    %v1020 = vmul.f32 %v1019, 1.442695
    %v1021 = vpow.pop %v1020
    %v1022 = vadd.f32 %v1021, 1.0
    %v1023 = vrcp.pop %v1022
    %v1024 = vmul.f32 1.0, %v1023
    %v1025 = vmul.f32 %v1024, 2.0
    %v1026 = vsub.f32 %v1025, 1.0
    %v1027 = vsel %vm213, %v1026, %v1024
    %v1028 = vmul.f32 %v1027, %v934
    %1030 = vrot.lane.b32.xlu0 %v1027, 64
    %v1031 = vpop.permute.xlu0 %1030
    %v1033 = vmul.f32 %v1027, %v1031
    %1035 = vrot.lane.b32.xlu0 %v1033, 32
    %v1036 = vpop.permute.xlu0 %1035
    %v1038 = vadd.f32 %v1028, %v1036
    %v1039 = vtanh.pop %v1038
    %1041 = vrot.lane.b32.xlu0 %v1039, 64
    %v1042 = vpop.permute.xlu0 %1041
    %v1044 = vmul.f32 %v1027, %v1042
    %v1045 = vld [vmem:[#allocation8] sm:$0xff]
    %v1046 = vld [vmem:[#allocation8 + $0x8] sm:$0xff]
    %v1047 = vld [vmem:[#allocation8 + $0x10] sm:$0xff]
    %v1048 = vld [vmem:[#allocation8 + $0x18] sm:$0xff]
    %v1049 = vld [vmem:[%s4] sm:$0x1]
    %v1051 = vlaneseq
    %v1052 = vshrl.u32 %v1051, 7
    %v1053 = vsub.s32 0, %v1052
    %v1054 = vrot.slane %v1049, %v1053
    %1057 = vrot.lane.b32.xlu0 %v1044, 32
    %v1058 = vpop.permute.xlu0 %1057
    %v1059 = vsel %vm214, %v1058, 0
    %1061 = vmatprep.subr.mxu0 0.0
    %1062 = vmatpush1.msra.mxu0 0.0
    %1063 = vmatprep.subr.mxu0 0.0
    %1064 = vmatpush1.msra.mxu0 0.0
    %1065 = vmatprep.subr.mxu0 0.0
    %1066 = vmatpush1.msra.mxu0 0.0
    %1067 = vmatprep.subr.mxu0 0.0
    %1068 = vmatpush1.msra.mxu0 0.0
    %1069 = vmatprep.subr.mxu0 0.0
    %1070 = vmatpush1.msra.mxu0 0.0
    %1071 = vmatprep.subr.mxu0 0.0
    %1072 = vmatpush1.msra.mxu0 0.0
    %1073 = vmatprep.subr.mxu0 0.0
    %1074 = vmatpush1.msra.mxu0 0.0
    %1075 = vmatprep.subr.mxu0 0.0
    %1076 = vmatpush1.msra.mxu0 0.0
    %1077 = vmatprep.subr.mxu0 0.0
    %1078 = vmatpush1.msra.mxu0 0.0
    %1079 = vmatprep.subr.mxu0 0.0
    %1080 = vmatpush1.msra.mxu0 0.0
    %1081 = vmatprep.subr.mxu0 0.0
    %1082 = vmatpush1.msra.mxu0 0.0
    %1083 = vmatprep.subr.mxu0 0.0
    %1084 = vmatpush1.msra.mxu0 0.0
    %1085 = vmatprep.subr.mxu0 0.0
    %1086 = vmatpush1.msra.mxu0 %v1048
    %1087 = vmatprep.subr.mxu0 0.0
    %1088 = vmatpush1.msra.mxu0 %v1047
    %1089 = vmatprep.subr.mxu0 0.0
    %1090 = vmatpush1.msra.mxu0 %v1046
    %1091 = vmatprep.subr.mxu0 0.0
    %1092 = vmatpush1.msra.mxu0 %v1045
    %1093 = vmatprep.subr.mxu0 0.0
    %1094 = vmatpush2.msra.mxu0 0.0
    %1095 = vmatprep.subr.mxu0 0.0
    %1096 = vmatpush2.msra.mxu0 0.0
    %1097 = vmatprep.subr.mxu0 0.0
    %1098 = vmatpush2.msra.mxu0 0.0
    %1099 = vmatprep.subr.mxu0 0.0
    %1100 = vmatpush2.msra.mxu0 0.0
    %1101 = vmatprep.subr.mxu0 0.0
    %1102 = vmatpush2.msra.mxu0 0.0
    %1103 = vmatprep.subr.mxu0 0.0
    %1104 = vmatpush2.msra.mxu0 0.0
    %1105 = vmatprep.subr.mxu0 0.0
    %1106 = vmatpush2.msra.mxu0 0.0
    %1107 = vmatprep.subr.mxu0 0.0
    %1108 = vmatpush2.msra.mxu0 0.0
    %1109 = vmatprep.subr.mxu0 0.0
    %1110 = vmatpush2.msra.mxu0 0.0
    %1111 = vmatprep.subr.mxu0 0.0
    %1112 = vmatpush2.msra.mxu0 0.0
    %1113 = vmatprep.subr.mxu0 0.0
    %1114 = vmatpush2.msra.mxu0 0.0
    %1115 = vmatprep.subr.mxu0 0.0
    %1116 = vmatpush2.msra.mxu0 0.0
    %1117 = vmatprep.subr.mxu0 0.0
    %1118 = vmatpush2.msra.mxu0 0.0
    %1119 = vmatprep.subr.mxu0 0.0
    %1120 = vmatpush2.msra.mxu0 0.0
    %1121 = vmatprep.subr.mxu0 0.0
    %1122 = vmatpush2.msra.mxu0 0.0
    %1123 = vmatprep.subr.mxu0 0.0
    %1124 = vmatpush2.msra.mxu0 0.0
    %1125 = vmatprep.mubr.f32.mxu0 0.0
    %1126 = vmatmul.mubr.f32.gmra.mxu0 %v1059
    %v1127 = vpop.f32.mrf.mxu0
    %v1128 = vadd.f32 %v1054, %v1127
    %v1129 = vpop.f32.mrf.mxu0
    %1130 = vdwg.mxu0
    %1131 = vmax.xlane.f32.xlu0 %v1128
    %v1132 = vpop.xlane.xlu0 %1131
    %v1133 = vsub.f32 %v1128, %v1132
    %v1134 = vmul.f32 %v1133, 1.442695
    %v1135 = vpow.pop %v1134
    %1136 = vadd.xlane.f32.xlu0 %v1135
    %v1137 = vpop.xlane.xlu0 %1136
    %v1138 = vlog2.pop %v1137
    %v1139 = vmul.f32 %v1138, 0.6931472
    %v1140 = vsub.f32 %v1133, %v1139
    %1141 = vst [vmem:[#allocation10] sm:$0xff] %v1140
    // Predicated region
    $region38: #{tpu_custom_call.1} parent=1 // pred_check
      _
    $region39: #{tpu_custom_call.1} parent=1 // pred_check_branch
      %1143 = sbr.rel (0) target = $region41
    $region40: #{tpu_custom_call.1} parent=1 // pred_region
      %s1145 = ssub.s32 128, 128
      %1146 = vsyncadd [#allocation4], %s1145
      %s1148 = sshll.u32 [#allocation10], 4
      %s1149 = int_to_ptr.vmem [resolvable:$true] %s1148
      %1151 = dma.vmem_to_hbm [thread:$0]  %s1149, 128, %s5, [#allocation4]
    $region41: #{tpu_custom_call.1} parent=1 // pred_fallthru
      _
    // Predicated region
    $region42: #{tpu_custom_call.1} parent=1 // pred_check
      _
    $region43: #{tpu_custom_call.1} parent=1 // pred_check_branch
      %1153 = sbr.rel (0) target = $region45
    $region44: #{tpu_custom_call.1} parent=1 // pred_region
      %1154 = dma.done [#allocation4], 128
    $region45: #{tpu_custom_call.1} parent=1 // pred_fallthru
      _
    %1155 = vsyncpa [#allocation3], 1
    %1156 = vsyncpa [#allocation6], 1
    %1157 = vsyncpa [#allocation9], 1
    %1158 = vsyncpa [#allocation4], 1

</llo_original>
